<compile_context>
chip_gen: v5e
topology: v5e:2x2
jax: 0.10.0
libtpu: 0.0.40
codegen_flags: <defaults>
</compile_context>

<pallas_src>
import numpy as np
import jax
import jax.numpy as jnp
from jax import lax
from jax.experimental import pallas as pl
from jax.experimental.pallas import tpu as pltpu

_VMEM = pl.BlockSpec(memory_space=pltpu.MemorySpace.VMEM)


# ------------------------------ Pallas kernel -------------------------------

def fused_convt_silu_convt_kernel(x_ref, w1_ref, b1_ref, m_ref, b2_ref, o_ref):
    # stage 1: per-pixel 1x1 transposed conv (block matmul) + bias + SiLU (EUP sigmoid).
    v1 = jnp.dot(x_ref[...], w1_ref[...],
                 preferred_element_type=jnp.float32,
                 precision=lax.Precision.HIGHEST) + b1_ref[...]
    v3 = v1 * jax.nn.sigmoid(v1)
    # stage 2: 5x5 stride-3 transposed conv as matmul against the precomputed
    # weight-scatter matrix, + bias.  v3 stays on-chip (never written to HBM).
    o_ref[...] = jnp.dot(v3, m_ref[...],
                         preferred_element_type=jnp.float32,
                         precision=lax.Precision.HIGHEST) + b2_ref[...]


# --------------------------- one-time parameter prep -------------------------

def prepare_params(w1, b1, w2, b2, Hin, Win, stride):
    """Fold both ConvTranspose2d weights into dense matmul operands (host-side, once).

    w1: (Cin, Cmid, 1, 1)   ConvTranspose2d(12, 4, 1, stride=1, padding=0)
    w2: (Cmid, Cout, K, K)  ConvTranspose2d(4, 12, 5, stride=3, padding=0)
    Folding assumes padding=0, output_padding=0, dilation=1, groups=1 for both layers.
    """
    w1_np = np.asarray(w1, dtype=np.float32)
    w2_np = np.asarray(w2, dtype=np.float32)
    assert w1_np.ndim == 4 and w1_np.shape[2:] == (1, 1), "layer1 must be a 1x1 kernel"
    assert w2_np.ndim == 4 and w2_np.shape[2] == w2_np.shape[3], "layer2 kernel must be square"
    assert w1_np.shape[1] == w2_np.shape[0], "channel mismatch between layers"
    assert stride >= 1

    w1_np = w1_np[:, :, 0, 0]                   # (Cin, Cmid)
    Cin, Cmid = w1_np.shape
    _, Cout, K, _ = w2_np.shape
    P = Hin * Win
    Hout = (Hin - 1) * stride + K               # padding=0, output_padding=0, dilation=1
    Wout = (Win - 1) * stride + K
    Q = Cout * Hout * Wout

    # stage-1 block matrix: rows (ci, p), cols (c, p) -- pointwise conv per pixel.
    W1_block = np.zeros((Cin, P, Cmid, P), dtype=np.float32)
    for p in range(P):
        W1_block[:, p, :, p] = w1_np
    W1_block = W1_block.reshape(Cin * P, Cmid * P)
    b1_full = np.repeat(np.asarray(b1, dtype=np.float32), P).reshape(1, Cmid * P)

    # stage-2 scatter matrix: rows (c, p=h*Win+w), cols (co, oh, ow).
    M = np.zeros((Cmid, P, Cout, Hout, Wout), dtype=np.float32)
    for h in range(Hin):
        for w in range(Win):
            p = h * Win + w
            for kh in range(K):
                for kw in range(K):
                    M[:, p, :, stride * h + kh, stride * w + kw] = w2_np[:, :, kh, kw]
    M = M.reshape(Cmid * P, Q)
    b2_full = np.repeat(np.asarray(b2, dtype=np.float32), Hout * Wout).reshape(1, Q)

    return dict(
        W1=jnp.asarray(W1_block), b1f=jnp.asarray(b1_full),
        M=jnp.asarray(M), b2f=jnp.asarray(b2_full),
        Cout=Cout, Hout=Hout, Wout=Wout, Q=Q,
    )


# ---------------------------------- forward ----------------------------------

def model_forward(x, prep, row_tile=256):
    """x: (N, Cin, H, W) f32 NCHW -> (N, Cout, Hout, Wout). Reshapes here are views."""
    N = x.shape[0]
    x_flat = x.reshape(N, -1)                    # (N, Cin*H*W), NCHW row-major
    CinP = x_flat.shape[1]
    CmidP = prep["W1"].shape[1]
    Q = prep["Q"]

    def cost(n_rows):
        flops = 2 * n_rows * (CinP * CmidP + CmidP * Q)
        bytes_acc = 4 * (n_rows * CinP + CinP * CmidP + CmidP
                         + CmidP * Q + Q + n_rows * Q)
        return pl.CostEstimate(flops=flops, transcendentals=n_rows * CmidP,
                               bytes_accessed=bytes_acc)

    operands = (x_flat, prep["W1"], prep["b1f"], prep["M"], prep["b2f"])

    if N <= row_tile:
        # Launch/DMA-bound regime: single gridless call, everything VMEM-resident.
        out_flat = pl.pallas_call(
            fused_convt_silu_convt_kernel,
            out_shape=jax.ShapeDtypeStruct((N, Q), jnp.float32),
            in_specs=[_VMEM] * 5,
            out_specs=_VMEM,
            cost_estimate=cost(N),
        )(*operands)
    else:
        # Amortized path for large batches: grid over rows; weights/biases pinned to
        # block (0,0) so they stay VMEM-resident; "parallel" rows engage both v7x TCs.
        Npad = ((N + row_tile - 1) // row_tile) * row_tile
        if Npad != N:
            x_flat = jnp.pad(x_flat, ((0, Npad - N), (0, 0)))
            operands = (x_flat,) + operands[1:]
        out_flat = pl.pallas_call(
            fused_convt_silu_convt_kernel,
            out_shape=jax.ShapeDtypeStruct((Npad, Q), jnp.float32),
            grid=(Npad // row_tile,),
            in_specs=[
                pl.BlockSpec((row_tile, CinP), lambda i: (i, 0)),
                pl.BlockSpec((CinP, CmidP),    lambda i: (0, 0)),
                pl.BlockSpec((1, CmidP),       lambda i: (0, 0)),
                pl.BlockSpec((CmidP, Q),       lambda i: (0, 0)),
                pl.BlockSpec((1, Q),           lambda i: (0, 0)),
            ],
            out_specs=pl.BlockSpec((row_tile, Q), lambda i: (i, 0)),
            compiler_params=pltpu.CompilerParams(dimension_semantics=("parallel",)),
            cost_estimate=cost(Npad),
        )(*operands)
        out_flat = out_flat[:N]

    return out_flat.reshape(N, prep["Cout"], prep["Hout"], prep["Wout"])   # NCHW


# ------------------------------ pure-JAX reference ----------------------------

def reference_forward(x, w1, b1, w2, b2):
    v1 = jnp.einsum('nihw,io->nohw', x, w1[:, :, 0, 0]) + b1[None, :, None, None]
    v3 = v1 * (1.0 / (1.0 + jnp.exp(-v1)))
    N, C, H, W = v3.shape
    Cout, K = w2.shape[1], w2.shape[2]
    s = 3
    Hout, Wout = (H - 1) * s + K, (W - 1) * s + K
    out = jnp.broadcast_to(b2[None, :, None, None], (N, Cout, Hout, Wout)).astype(jnp.float32)
    for h in range(H):
        for w in range(W):
            contrib = jnp.einsum('nc,cokl->nokl', v3[:, :, h, w], w2)
            out = out.at[:, :, s * h:s * h + K, s * w:s * w + K].add(contrib)
    return out


# ------------------------------------ main ------------------------------------

if __name__ == "__main__":
    key = jax.random.PRNGKey(0)
    k1, k2, k3, k4, kx, kb = jax.random.split(key, 6)

    # Deterministic parameter init (shapes from the module's __init__).
    w1 = jax.random.normal(k1, (12, 4, 1, 1), jnp.float32) * 0.3   # ConvTranspose2d(12,4,1)
    b1 = jax.random.normal(k2, (4,), jnp.float32) * 0.1
    w2 = jax.random.normal(k3, (4, 12, 5, 5), jnp.float32) * 0.2   # ConvTranspose2d(4,12,5,stride=3)
    b2 = jax.random.normal(k4, (12,), jnp.float32) * 0.1

    prep = prepare_params(w1, b1, w2, b2, Hin=5, Win=2, stride=3)

    # --- small case, matches the module's example input: (2, 12, 5, 2) NCHW ---
    x = jax.random.normal(kx, (2, 12, 5, 2), jnp.float32)
    fwd = jax.jit(lambda xi: model_forward(xi, prep))
    out = jax.block_until_ready(fwd(x))
    ref = reference_forward(x, w1, b1, w2, b2)
    assert out.shape == (2, 12, 17, 8), out.shape
    assert np.allclose(np.asarray(out), np.asarray(ref), rtol=1e-4, atol=1e-4), \
        float(np.max(np.abs(np.asarray(out) - np.asarray(ref))))

    # --- exercise the batched/gridded (weight-resident, parallel-rows) path ---
    xb = jax.random.normal(kb, (16, 12, 5, 2), jnp.float32)
    fwd_b = jax.jit(lambda xi: model_forward(xi, prep, row_tile=8))
    out_b = jax.block_until_ready(fwd_b(xb))
    ref_b = reference_forward(xb, w1, b1, w2, b2)
    assert out_b.shape == (16, 12, 17, 8), out_b.shape
    assert np.allclose(np.asarray(out_b), np.asarray(ref_b), rtol=1e-4, atol=1e-4), \
        float(np.max(np.abs(np.asarray(out_b) - np.asarray(ref_b))))

    print("KERNEL_OK")
</pallas_src>

<mosaic_0001>
module attributes {stable_mosaic.version = 11 : i64} {
  func.func @fused_convt_silu_convt_kernel(%arg0: memref<2x120xf32, #tpu.memory_space<vmem>>, %arg1: memref<120x40xf32, #tpu.memory_space<vmem>>, %arg2: memref<1x40xf32, #tpu.memory_space<vmem>>, %arg3: memref<40x1632xf32, #tpu.memory_space<vmem>>, %arg4: memref<1x1632xf32, #tpu.memory_space<vmem>>, %arg5: memref<2x1632xf32, #tpu.memory_space<vmem>>) attributes {dimension_semantics = [], scalar_prefetch = 0 : i64, scratch_operands = 0 : i64, tpu.core_type = #tpu.core_type<tc>} {
    %c0 = arith.constant 0 : index
    %c0_0 = arith.constant 0 : index
    %0 = vector.load %arg0[%c0, %c0_0] : memref<2x120xf32, #tpu.memory_space<vmem>>, vector<2x120xf32>
    %c0_1 = arith.constant 0 : index
    %c0_2 = arith.constant 0 : index
    %1 = vector.load %arg1[%c0_1, %c0_2] : memref<120x40xf32, #tpu.memory_space<vmem>>, vector<120x40xf32>
    %cst = arith.constant dense<0.000000e+00> : vector<2x40xf32>
    %2 = tpu.matmul %0, %1, %cst {dimension_numbers = #tpu.dot_dimension_numbers<[1], [0], [0], [1], [0, 0, 1, 1], [], []>, precision = #tpu.contract_precision<fp32>} : vector<2x120xf32>, vector<120x40xf32>, vector<2x40xf32> -> vector<2x40xf32>
    %c0_3 = arith.constant 0 : index
    %c0_4 = arith.constant 0 : index
    %3 = vector.load %arg2[%c0_3, %c0_4] : memref<1x40xf32, #tpu.memory_space<vmem>>, vector<1x40xf32>
    %4 = vector.broadcast %3 : vector<1x40xf32> to vector<2x40xf32>
    %5 = arith.addf %2, %4 : vector<2x40xf32>
    %6 = arith.negf %5 : vector<2x40xf32>
    %7 = math.exp %6 : vector<2x40xf32>
    %cst_5 = arith.constant 1.000000e+00 : f32
    %8 = vector.broadcast %cst_5 : f32 to vector<2x40xf32>
    %9 = arith.addf %8, %7 : vector<2x40xf32>
    %10 = arith.divf %8, %9 : vector<2x40xf32>
    %11 = arith.mulf %5, %10 : vector<2x40xf32>
    %c0_6 = arith.constant 0 : index
    %c0_7 = arith.constant 0 : index
    %12 = vector.load %arg3[%c0_6, %c0_7] : memref<40x1632xf32, #tpu.memory_space<vmem>>, vector<40x1632xf32>
    %cst_8 = arith.constant dense<0.000000e+00> : vector<2x1632xf32>
    %13 = tpu.matmul %11, %12, %cst_8 {dimension_numbers = #tpu.dot_dimension_numbers<[1], [0], [0], [1], [0, 0, 1, 1], [], []>, precision = #tpu.contract_precision<fp32>} : vector<2x40xf32>, vector<40x1632xf32>, vector<2x1632xf32> -> vector<2x1632xf32>
    %c0_9 = arith.constant 0 : index
    %c0_10 = arith.constant 0 : index
    %14 = vector.load %arg4[%c0_9, %c0_10] : memref<1x1632xf32, #tpu.memory_space<vmem>>, vector<1x1632xf32>
    %15 = vector.broadcast %14 : vector<1x1632xf32> to vector<2x1632xf32>
    %16 = arith.addf %13, %15 : vector<2x1632xf32>
    %c0_11 = arith.constant 0 : index
    %c0_12 = arith.constant 0 : index
    %17 = vector.load %arg5[%c0_11, %c0_12] : memref<2x1632xf32, #tpu.memory_space<vmem>>, vector<2x1632xf32>
    tpu.vector_store %arg5[%c0_11, %c0_12], %16 {strides = array<i32>} : memref<2x1632xf32, #tpu.memory_space<vmem>>, vector<2x1632xf32>,
    return
  }
}

</mosaic_0001>

<llo_original>
// kernel: _lambda_.1
$region0: #{_lambda_.1}
  #allocation0 [shape = 'u32[]', space=smem, size = 0x4, offset = 0x4, fixed_abs, tag = 'smem constant byte address 0x4 - core index']
  #allocation1 [shape = 'u32[72,128]{1,0:T(1,128)}', space=vmem, size = 0x9000, scoped, tag = 'internal scratch']
  %s0 = inlined_call_operand.vmem [shape: f32[2,120], index: 0, kind: input, shape index: {}]
  %s1 = inlined_call_operand.vmem [shape: f32[120,40], index: 1, kind: input, shape index: {}]
  %s2 = inlined_call_operand.vmem [shape: f32[1,40], index: 2, kind: input, shape index: {}]
  %s3 = inlined_call_operand.hbm [shape: f32[40,1632], index: 3, kind: input, shape index: {}]
  %s4 = inlined_call_operand.vmem [shape: f32[1,1632], index: 4, kind: input, shape index: {}]
  %s5 = inlined_call_operand.vmem [shape: f32[2,1632], index: 5, kind: output, shape index: {}]
  %s6 = sld [smem:[#allocation0]]
  $region34: #{_lambda_.1} parent=0
    _
  %s8 = ssub.s32 1, %s6
  %s9 = scalar_select 0, %s8, %s6
  $region1: #{_lambda_.1} parent=0
    #allocation2 [shape = 'u8[266240]{0}', space=vmem, size = 0x41000, scoped, tag = 'input window, operand 3, single buffered']
    #allocation3 [shape = 's32[1]{0}', space=sflag, size = 0x4, scoped, tag = 'scoped memory for _lambda_.1']
    %10 = vsyncpa [#allocation3], 0
    // Predicated region
    $region2: #{_lambda_.1} parent=1 // pred_check
      _
    $region3: #{_lambda_.1} parent=1 // pred_check_branch
      %12 = sbr.rel (0) target = $region5
    $region4: #{_lambda_.1} parent=1 // pred_region
      _
    $region5: #{_lambda_.1} parent=1 // pred_fallthru
      _
    // Predicated region
    $region6: #{_lambda_.1} parent=1 // pred_check
      _
    $region7: #{_lambda_.1} parent=1 // pred_check_branch
      %14 = sbr.rel (0) target = $region9
    $region8: #{_lambda_.1} parent=1 // pred_region
      _
    $region9: #{_lambda_.1} parent=1 // pred_fallthru
      _
    // Predicated region
    $region10: #{_lambda_.1} parent=1 // pred_check
      _
    $region11: #{_lambda_.1} parent=1 // pred_check_branch
      %16 = sbr.rel (0) target = $region13
    $region12: #{_lambda_.1} parent=1 // pred_region
      _
    $region13: #{_lambda_.1} parent=1 // pred_fallthru
      _
    // Predicated region
    $region14: #{_lambda_.1} parent=1 // pred_check
      _
    $region15: #{_lambda_.1} parent=1 // pred_check_branch
      %18 = sbr.rel (0) target = $region17
    $region16: #{_lambda_.1} parent=1 // pred_region
      %20 = vsyncadd [#allocation3], 0
      %s21 = sshll.u32 %s3, 4
      %s22 = int_to_ptr.hbm [resolvable:$true] %s21
      %s23 = sshll.u32 [#allocation2], 4
      %s24 = int_to_ptr.vmem [resolvable:$true] %s23
      %29 = dma.hbm_to_vmem [thread:$0]  %s22, 8320, %s24, [#allocation3], 1664, 1664, 104
    $region17: #{_lambda_.1} parent=1 // pred_fallthru
      _
    // Predicated region
    $region18: #{_lambda_.1} parent=1 // pred_check
      _
    $region19: #{_lambda_.1} parent=1 // pred_check_branch
      %31 = sbr.rel (0) target = $region21
    $region20: #{_lambda_.1} parent=1 // pred_region
      _
    $region21: #{_lambda_.1} parent=1 // pred_fallthru
      _
    // Predicated region
    $region22: #{_lambda_.1} parent=1 // pred_check
      _
    $region23: #{_lambda_.1} parent=1 // pred_check_branch
      %33 = sbr.rel (0) target = $region25
    $region24: #{_lambda_.1} parent=1 // pred_region
      %35 = dma.done [#allocation3], 8320
    $region25: #{_lambda_.1} parent=1 // pred_fallthru
      _
    %v36 = vld [vmem:[%s0] sm:$0x3]
    %v37 = vld [vmem:[%s1] sm:$0xff]
    %v38 = vld [vmem:[%s1 + $0x8] sm:$0xff]
    %v39 = vld [vmem:[%s1 + $0x10] sm:$0xff]
    %v40 = vld [vmem:[%s1 + $0x18] sm:$0xff]
    %v41 = vld [vmem:[%s1 + $0x20] sm:$0xff]
    %v42 = vld [vmem:[%s1 + $0x28] sm:$0xff]
    %v43 = vld [vmem:[%s1 + $0x30] sm:$0xff]
    %v44 = vld [vmem:[%s1 + $0x38] sm:$0xff]
    %v45 = vld [vmem:[%s1 + $0x40] sm:$0xff]
    %v46 = vld [vmem:[%s1 + $0x48] sm:$0xff]
    %v47 = vld [vmem:[%s1 + $0x50] sm:$0xff]
    %v48 = vld [vmem:[%s1 + $0x58] sm:$0xff]
    %v49 = vld [vmem:[%s1 + $0x60] sm:$0xff]
    %v50 = vld [vmem:[%s1 + $0x68] sm:$0xff]
    %v51 = vld [vmem:[%s1 + $0x70] sm:$0xff]
    %v52 = vld [vmem:[%s2] sm:$0x1]
    %v54 = vperm.slane %v52, 0
    %vm56 = vcmask 982016
    %v58 = vsel %vm56, %v36, 0
    %60 = vmatpush.msra.mxu0 0.0
    %v61 = vand.u32 %v51, 4294901760
    %62 = vmatpush.msra.mxu0 %v61
    %v63 = vand.u32 %v50, 4294901760
    %64 = vmatpush.msra.mxu0 %v63
    %v65 = vand.u32 %v49, 4294901760
    %66 = vmatpush.msra.mxu0 %v65
    %v67 = vand.u32 %v48, 4294901760
    %68 = vmatpush.msra.mxu0 %v67
    %v69 = vand.u32 %v47, 4294901760
    %70 = vmatpush.msra.mxu0 %v69
    %v71 = vand.u32 %v46, 4294901760
    %72 = vmatpush.msra.mxu0 %v71
    %v73 = vand.u32 %v45, 4294901760
    %74 = vmatpush.msra.mxu0 %v73
    %v75 = vand.u32 %v44, 4294901760
    %76 = vmatpush.msra.mxu0 %v75
    %v77 = vand.u32 %v43, 4294901760
    %78 = vmatpush.msra.mxu0 %v77
    %v79 = vand.u32 %v42, 4294901760
    %80 = vmatpush.msra.mxu0 %v79
    %v81 = vand.u32 %v41, 4294901760
    %82 = vmatpush.msra.mxu0 %v81
    %v83 = vand.u32 %v40, 4294901760
    %84 = vmatpush.msra.mxu0 %v83
    %v85 = vand.u32 %v39, 4294901760
    %86 = vmatpush.msra.mxu0 %v85
    %v87 = vand.u32 %v38, 4294901760
    %88 = vmatpush.msra.mxu0 %v87
    %v89 = vand.u32 %v37, 4294901760
    %90 = vmatpush.msra.mxu0 %v89
    %v91 = vand.u32 %v58, 4294901760
    %v92 = vsub.f32 %v58, %v91
    %v93 = vand.u32 %v92, 4294901760
    %v94 = vsub.f32 %v92, %v93
    %v95 = vand.u32 %v94, 4294901760
    %96 = vmatmul.f32.gmra.mxu0 %v95
    %v97 = vpop.f32.mrf.mxu0
    %v98 = vadd.f32 %v54, %v97
    %99 = vdwg.mxu0
    %100 = vmatpush.msra.mxu0 0.0
    %v101 = vand.u32 %v51, 4294901760
    %v102 = vsub.f32 %v51, %v101
    %v103 = vand.u32 %v102, 4294901760
    %v104 = vsub.f32 %v102, %v103
    %v105 = vand.u32 %v104, 4294901760
    %106 = vmatpush.msra.mxu0 %v105
    %v107 = vand.u32 %v50, 4294901760
    %v108 = vsub.f32 %v50, %v107
    %v109 = vand.u32 %v108, 4294901760
    %v110 = vsub.f32 %v108, %v109
    %v111 = vand.u32 %v110, 4294901760
    %112 = vmatpush.msra.mxu0 %v111
    %v113 = vand.u32 %v49, 4294901760
    %v114 = vsub.f32 %v49, %v113
    %v115 = vand.u32 %v114, 4294901760
    %v116 = vsub.f32 %v114, %v115
    %v117 = vand.u32 %v116, 4294901760
    %118 = vmatpush.msra.mxu0 %v117
    %v119 = vand.u32 %v48, 4294901760
    %v120 = vsub.f32 %v48, %v119
    %v121 = vand.u32 %v120, 4294901760
    %v122 = vsub.f32 %v120, %v121
    %v123 = vand.u32 %v122, 4294901760
    %124 = vmatpush.msra.mxu0 %v123
    %v125 = vand.u32 %v47, 4294901760
    %v126 = vsub.f32 %v47, %v125
    %v127 = vand.u32 %v126, 4294901760
    %v128 = vsub.f32 %v126, %v127
    %v129 = vand.u32 %v128, 4294901760
    %130 = vmatpush.msra.mxu0 %v129
    %v131 = vand.u32 %v46, 4294901760
    %v132 = vsub.f32 %v46, %v131
    %v133 = vand.u32 %v132, 4294901760
    %v134 = vsub.f32 %v132, %v133
    %v135 = vand.u32 %v134, 4294901760
    %136 = vmatpush.msra.mxu0 %v135
    %v137 = vand.u32 %v45, 4294901760
    %v138 = vsub.f32 %v45, %v137
    %v139 = vand.u32 %v138, 4294901760
    %v140 = vsub.f32 %v138, %v139
    %v141 = vand.u32 %v140, 4294901760
    %142 = vmatpush.msra.mxu0 %v141
    %v143 = vand.u32 %v44, 4294901760
    %v144 = vsub.f32 %v44, %v143
    %v145 = vand.u32 %v144, 4294901760
    %v146 = vsub.f32 %v144, %v145
    %v147 = vand.u32 %v146, 4294901760
    %148 = vmatpush.msra.mxu0 %v147
    %v149 = vand.u32 %v43, 4294901760
    %v150 = vsub.f32 %v43, %v149
    %v151 = vand.u32 %v150, 4294901760
    %v152 = vsub.f32 %v150, %v151
    %v153 = vand.u32 %v152, 4294901760
    %154 = vmatpush.msra.mxu0 %v153
    %v155 = vand.u32 %v42, 4294901760
    %v156 = vsub.f32 %v42, %v155
    %v157 = vand.u32 %v156, 4294901760
    %v158 = vsub.f32 %v156, %v157
    %v159 = vand.u32 %v158, 4294901760
    %160 = vmatpush.msra.mxu0 %v159
    %v161 = vand.u32 %v41, 4294901760
    %v162 = vsub.f32 %v41, %v161
    %v163 = vand.u32 %v162, 4294901760
    %v164 = vsub.f32 %v162, %v163
    %v165 = vand.u32 %v164, 4294901760
    %166 = vmatpush.msra.mxu0 %v165
    %v167 = vand.u32 %v40, 4294901760
    %v168 = vsub.f32 %v40, %v167
    %v169 = vand.u32 %v168, 4294901760
    %v170 = vsub.f32 %v168, %v169
    %v171 = vand.u32 %v170, 4294901760
    %172 = vmatpush.msra.mxu0 %v171
    %v173 = vand.u32 %v39, 4294901760
    %v174 = vsub.f32 %v39, %v173
    %v175 = vand.u32 %v174, 4294901760
    %v176 = vsub.f32 %v174, %v175
    %v177 = vand.u32 %v176, 4294901760
    %178 = vmatpush.msra.mxu0 %v177
    %v179 = vand.u32 %v38, 4294901760
    %v180 = vsub.f32 %v38, %v179
    %v181 = vand.u32 %v180, 4294901760
    %v182 = vsub.f32 %v180, %v181
    %v183 = vand.u32 %v182, 4294901760
    %184 = vmatpush.msra.mxu0 %v183
    %v185 = vand.u32 %v37, 4294901760
    %v186 = vsub.f32 %v37, %v185
    %v187 = vand.u32 %v186, 4294901760
    %v188 = vsub.f32 %v186, %v187
    %v189 = vand.u32 %v188, 4294901760
    %190 = vmatpush.msra.mxu0 %v189
    %v191 = vand.u32 %v58, 4294901760
    %192 = vmatmul.f32.gmra.mxu0 %v191
    %v193 = vpop.f32.mrf.mxu0
    %v194 = vadd.f32 %v98, %v193
    %195 = vdwg.mxu0
    %196 = vmatpush.msra.mxu0 0.0
    %v197 = vand.u32 %v51, 4294901760
    %v198 = vsub.f32 %v51, %v197
    %199 = vmatpush.msra.mxu0 %v198
    %v200 = vand.u32 %v50, 4294901760
    %v201 = vsub.f32 %v50, %v200
    %202 = vmatpush.msra.mxu0 %v201
    %v203 = vand.u32 %v49, 4294901760
    %v204 = vsub.f32 %v49, %v203
    %205 = vmatpush.msra.mxu0 %v204
    %v206 = vand.u32 %v48, 4294901760
    %v207 = vsub.f32 %v48, %v206
    %208 = vmatpush.msra.mxu0 %v207
    %v209 = vand.u32 %v47, 4294901760
    %v210 = vsub.f32 %v47, %v209
    %211 = vmatpush.msra.mxu0 %v210
    %v212 = vand.u32 %v46, 4294901760
    %v213 = vsub.f32 %v46, %v212
    %214 = vmatpush.msra.mxu0 %v213
    %v215 = vand.u32 %v45, 4294901760
    %v216 = vsub.f32 %v45, %v215
    %217 = vmatpush.msra.mxu0 %v216
    %v218 = vand.u32 %v44, 4294901760
    %v219 = vsub.f32 %v44, %v218
    %220 = vmatpush.msra.mxu0 %v219
    %v221 = vand.u32 %v43, 4294901760
    %v222 = vsub.f32 %v43, %v221
    %223 = vmatpush.msra.mxu0 %v222
    %v224 = vand.u32 %v42, 4294901760
    %v225 = vsub.f32 %v42, %v224
    %226 = vmatpush.msra.mxu0 %v225
    %v227 = vand.u32 %v41, 4294901760
    %v228 = vsub.f32 %v41, %v227
    %229 = vmatpush.msra.mxu0 %v228
    %v230 = vand.u32 %v40, 4294901760
    %v231 = vsub.f32 %v40, %v230
    %232 = vmatpush.msra.mxu0 %v231
    %v233 = vand.u32 %v39, 4294901760
    %v234 = vsub.f32 %v39, %v233
    %235 = vmatpush.msra.mxu0 %v234
    %v236 = vand.u32 %v38, 4294901760
    %v237 = vsub.f32 %v38, %v236
    %238 = vmatpush.msra.mxu0 %v237
    %v239 = vand.u32 %v37, 4294901760
    %v240 = vsub.f32 %v37, %v239
    %241 = vmatpush.msra.mxu0 %v240
    %v242 = vand.u32 %v58, 4294901760
    %v243 = vsub.f32 %v58, %v242
    %244 = vmatmul.f32.gmra.mxu0 %v243
    %v245 = vpop.f32.mrf.mxu0
    %v246 = vadd.f32 %v194, %v245
    %247 = vdwg.mxu0
    %248 = vmatpush.msra.mxu0 0.0
    %v249 = vand.u32 %v51, 4294901760
    %250 = vmatpush.msra.mxu0 %v249
    %v251 = vand.u32 %v50, 4294901760
    %252 = vmatpush.msra.mxu0 %v251
    %v253 = vand.u32 %v49, 4294901760
    %254 = vmatpush.msra.mxu0 %v253
    %v255 = vand.u32 %v48, 4294901760
    %256 = vmatpush.msra.mxu0 %v255
    %v257 = vand.u32 %v47, 4294901760
    %258 = vmatpush.msra.mxu0 %v257
    %v259 = vand.u32 %v46, 4294901760
    %260 = vmatpush.msra.mxu0 %v259
    %v261 = vand.u32 %v45, 4294901760
    %262 = vmatpush.msra.mxu0 %v261
    %v263 = vand.u32 %v44, 4294901760
    %264 = vmatpush.msra.mxu0 %v263
    %v265 = vand.u32 %v43, 4294901760
    %266 = vmatpush.msra.mxu0 %v265
    %v267 = vand.u32 %v42, 4294901760
    %268 = vmatpush.msra.mxu0 %v267
    %v269 = vand.u32 %v41, 4294901760
    %270 = vmatpush.msra.mxu0 %v269
    %v271 = vand.u32 %v40, 4294901760
    %272 = vmatpush.msra.mxu0 %v271
    %v273 = vand.u32 %v39, 4294901760
    %274 = vmatpush.msra.mxu0 %v273
    %v275 = vand.u32 %v38, 4294901760
    %276 = vmatpush.msra.mxu0 %v275
    %v277 = vand.u32 %v37, 4294901760
    %278 = vmatpush.msra.mxu0 %v277
    %v279 = vand.u32 %v58, 4294901760
    %v280 = vsub.f32 %v58, %v279
    %v281 = vand.u32 %v280, 4294901760
    %282 = vmatmul.f32.gmra.mxu0 %v281
    %v283 = vpop.f32.mrf.mxu0
    %v284 = vadd.f32 %v246, %v283
    %285 = vdwg.mxu0
    %286 = vmatpush.msra.mxu0 0.0
    %v287 = vand.u32 %v51, 4294901760
    %v288 = vsub.f32 %v51, %v287
    %v289 = vand.u32 %v288, 4294901760
    %290 = vmatpush.msra.mxu0 %v289
    %v291 = vand.u32 %v50, 4294901760
    %v292 = vsub.f32 %v50, %v291
    %v293 = vand.u32 %v292, 4294901760
    %294 = vmatpush.msra.mxu0 %v293
    %v295 = vand.u32 %v49, 4294901760
    %v296 = vsub.f32 %v49, %v295
    %v297 = vand.u32 %v296, 4294901760
    %298 = vmatpush.msra.mxu0 %v297
    %v299 = vand.u32 %v48, 4294901760
    %v300 = vsub.f32 %v48, %v299
    %v301 = vand.u32 %v300, 4294901760
    %302 = vmatpush.msra.mxu0 %v301
    %v303 = vand.u32 %v47, 4294901760
    %v304 = vsub.f32 %v47, %v303
    %v305 = vand.u32 %v304, 4294901760
    %306 = vmatpush.msra.mxu0 %v305
    %v307 = vand.u32 %v46, 4294901760
    %v308 = vsub.f32 %v46, %v307
    %v309 = vand.u32 %v308, 4294901760
    %310 = vmatpush.msra.mxu0 %v309
    %v311 = vand.u32 %v45, 4294901760
    %v312 = vsub.f32 %v45, %v311
    %v313 = vand.u32 %v312, 4294901760
    %314 = vmatpush.msra.mxu0 %v313
    %v315 = vand.u32 %v44, 4294901760
    %v316 = vsub.f32 %v44, %v315
    %v317 = vand.u32 %v316, 4294901760
    %318 = vmatpush.msra.mxu0 %v317
    %v319 = vand.u32 %v43, 4294901760
    %v320 = vsub.f32 %v43, %v319
    %v321 = vand.u32 %v320, 4294901760
    %322 = vmatpush.msra.mxu0 %v321
    %v323 = vand.u32 %v42, 4294901760
    %v324 = vsub.f32 %v42, %v323
    %v325 = vand.u32 %v324, 4294901760
    %326 = vmatpush.msra.mxu0 %v325
    %v327 = vand.u32 %v41, 4294901760
    %v328 = vsub.f32 %v41, %v327
    %v329 = vand.u32 %v328, 4294901760
    %330 = vmatpush.msra.mxu0 %v329
    %v331 = vand.u32 %v40, 4294901760
    %v332 = vsub.f32 %v40, %v331
    %v333 = vand.u32 %v332, 4294901760
    %334 = vmatpush.msra.mxu0 %v333
    %v335 = vand.u32 %v39, 4294901760
    %v336 = vsub.f32 %v39, %v335
    %v337 = vand.u32 %v336, 4294901760
    %338 = vmatpush.msra.mxu0 %v337
    %v339 = vand.u32 %v38, 4294901760
    %v340 = vsub.f32 %v38, %v339
    %v341 = vand.u32 %v340, 4294901760
    %342 = vmatpush.msra.mxu0 %v341
    %v343 = vand.u32 %v37, 4294901760
    %v344 = vsub.f32 %v37, %v343
    %v345 = vand.u32 %v344, 4294901760
    %346 = vmatpush.msra.mxu0 %v345
    %v347 = vand.u32 %v58, 4294901760
    %348 = vmatmul.f32.gmra.mxu0 %v347
    %v349 = vpop.f32.mrf.mxu0
    %v350 = vadd.f32 %v284, %v349
    %351 = vdwg.mxu0
    %352 = vmatpush.msra.mxu0 0.0
    %v353 = vand.u32 %v51, 4294901760
    %354 = vmatpush.msra.mxu0 %v353
    %v355 = vand.u32 %v50, 4294901760
    %356 = vmatpush.msra.mxu0 %v355
    %v357 = vand.u32 %v49, 4294901760
    %358 = vmatpush.msra.mxu0 %v357
    %v359 = vand.u32 %v48, 4294901760
    %360 = vmatpush.msra.mxu0 %v359
    %v361 = vand.u32 %v47, 4294901760
    %362 = vmatpush.msra.mxu0 %v361
    %v363 = vand.u32 %v46, 4294901760
    %364 = vmatpush.msra.mxu0 %v363
    %v365 = vand.u32 %v45, 4294901760
    %366 = vmatpush.msra.mxu0 %v365
    %v367 = vand.u32 %v44, 4294901760
    %368 = vmatpush.msra.mxu0 %v367
    %v369 = vand.u32 %v43, 4294901760
    %370 = vmatpush.msra.mxu0 %v369
    %v371 = vand.u32 %v42, 4294901760
    %372 = vmatpush.msra.mxu0 %v371
    %v373 = vand.u32 %v41, 4294901760
    %374 = vmatpush.msra.mxu0 %v373
    %v375 = vand.u32 %v40, 4294901760
    %376 = vmatpush.msra.mxu0 %v375
    %v377 = vand.u32 %v39, 4294901760
    %378 = vmatpush.msra.mxu0 %v377
    %v379 = vand.u32 %v38, 4294901760
    %380 = vmatpush.msra.mxu0 %v379
    %v381 = vand.u32 %v37, 4294901760
    %382 = vmatpush.msra.mxu0 %v381
    %v383 = vand.u32 %v58, 4294901760
    %384 = vmatmul.f32.gmra.mxu0 %v383
    %v385 = vpop.f32.mrf.mxu0
    %v386 = vadd.f32 %v350, %v385
    %387 = vdwg.mxu0
    %v388 = vxor.u32 %v386, 2147483648
    %v389 = vmul.f32 %v388, 1.442695
    %v390 = vpow.pop %v389
    %v391 = vadd.f32 %v390, 1.0
    %v392 = vrcp.pop %v391
    %v393 = vmul.f32 %v391, %v392
    %v394 = vsub.f32 1.0, %v393
    %v395 = vmul.f32 %v392, %v394
    %v396 = vadd.f32 %v392, %v395
    %vm397 = vweird.f32 %v391
    %vm398 = vweird.f32 %v392
    %vm399 = vmor %vm397, %vm398
    %v400 = vsel %vm399, %v392, %v396
    %v401 = vand.u32 2147483647, %v391
    %vm402 = vcmp.eq.f32.partialorder %v401, 8.507059e+37
    %v403 = vand.u32 %v391, 2147483648
    %v404 = vor.u32 1.1754944e-38, %v403
    %v405 = vsel %vm402, %v404, %v400
    %v406 = vmul.f32 1.0, %v405
    %v407 = vmul.f32 %v386, %v406
    %v408 = vld [vmem:[#allocation2] sm:$0xff]
    %v409 = vld [vmem:[#allocation2 + $0x8] sm:$0xff]
    %v410 = vld [vmem:[#allocation2 + $0x10] sm:$0xff]
    %v411 = vld [vmem:[#allocation2 + $0x18] sm:$0xff]
    %v412 = vld [vmem:[#allocation2 + $0x20] sm:$0xff]
    %v413 = vld [vmem:[#allocation2 + $0x28] sm:$0xff]
    %v414 = vld [vmem:[#allocation2 + $0x30] sm:$0xff]
    %v415 = vld [vmem:[#allocation2 + $0x38] sm:$0xff]
    %v416 = vld [vmem:[#allocation2 + $0x40] sm:$0xff]
    %v417 = vld [vmem:[#allocation2 + $0x48] sm:$0xff]
    %v418 = vld [vmem:[#allocation2 + $0x50] sm:$0xff]
    %v419 = vld [vmem:[#allocation2 + $0x58] sm:$0xff]
    %v420 = vld [vmem:[#allocation2 + $0x60] sm:$0xff]
    %v421 = vld [vmem:[#allocation2 + $0x68] sm:$0xff]
    %v422 = vld [vmem:[#allocation2 + $0x70] sm:$0xff]
    %v423 = vld [vmem:[#allocation2 + $0x78] sm:$0xff]
    %v424 = vld [vmem:[#allocation2 + $0x80] sm:$0xff]
    %v425 = vld [vmem:[#allocation2 + $0x88] sm:$0xff]
    %v426 = vld [vmem:[#allocation2 + $0x90] sm:$0xff]
    %v427 = vld [vmem:[#allocation2 + $0x98] sm:$0xff]
    %v428 = vld [vmem:[#allocation2 + $0xa0] sm:$0xff]
    %v429 = vld [vmem:[#allocation2 + $0xa8] sm:$0xff]
    %v430 = vld [vmem:[#allocation2 + $0xb0] sm:$0xff]
    %v431 = vld [vmem:[#allocation2 + $0xb8] sm:$0xff]
    %v432 = vld [vmem:[#allocation2 + $0xc0] sm:$0xff]
    %v433 = vld [vmem:[#allocation2 + $0xc8] sm:$0xff]
    %v434 = vld [vmem:[#allocation2 + $0xd0] sm:$0xff]
    %v435 = vld [vmem:[#allocation2 + $0xd8] sm:$0xff]
    %v436 = vld [vmem:[#allocation2 + $0xe0] sm:$0xff]
    %v437 = vld [vmem:[#allocation2 + $0xe8] sm:$0xff]
    %v438 = vld [vmem:[#allocation2 + $0xf0] sm:$0xff]
    %v439 = vld [vmem:[#allocation2 + $0xf8] sm:$0xff]
    %v440 = vld [vmem:[#allocation2 + $0x100] sm:$0xff]
    %v441 = vld [vmem:[#allocation2 + $0x108] sm:$0xff]
    %v442 = vld [vmem:[#allocation2 + $0x110] sm:$0xff]
    %v443 = vld [vmem:[#allocation2 + $0x118] sm:$0xff]
    %v444 = vld [vmem:[#allocation2 + $0x120] sm:$0xff]
    %v445 = vld [vmem:[#allocation2 + $0x128] sm:$0xff]
    %v446 = vld [vmem:[#allocation2 + $0x130] sm:$0xff]
    %v447 = vld [vmem:[#allocation2 + $0x138] sm:$0xff]
    %v448 = vld [vmem:[#allocation2 + $0x140] sm:$0xff]
    %v449 = vld [vmem:[#allocation2 + $0x148] sm:$0xff]
    %v450 = vld [vmem:[#allocation2 + $0x150] sm:$0xff]
    %v451 = vld [vmem:[#allocation2 + $0x158] sm:$0xff]
    %v452 = vld [vmem:[#allocation2 + $0x160] sm:$0xff]
    %v453 = vld [vmem:[#allocation2 + $0x168] sm:$0xff]
    %v454 = vld [vmem:[#allocation2 + $0x170] sm:$0xff]
    %v455 = vld [vmem:[#allocation2 + $0x178] sm:$0xff]
    %v456 = vld [vmem:[#allocation2 + $0x180] sm:$0xff]
    %v457 = vld [vmem:[#allocation2 + $0x188] sm:$0xff]
    %v458 = vld [vmem:[#allocation2 + $0x190] sm:$0xff]
    %v459 = vld [vmem:[#allocation2 + $0x198] sm:$0xff]
    %v460 = vld [vmem:[#allocation2 + $0x1a0] sm:$0xff]
    %v461 = vld [vmem:[#allocation2 + $0x1a8] sm:$0xff]
    %v462 = vld [vmem:[#allocation2 + $0x1b0] sm:$0xff]
    %v463 = vld [vmem:[#allocation2 + $0x1b8] sm:$0xff]
    %v464 = vld [vmem:[#allocation2 + $0x1c0] sm:$0xff]
    %v465 = vld [vmem:[#allocation2 + $0x1c8] sm:$0xff]
    %v466 = vld [vmem:[#allocation2 + $0x1d0] sm:$0xff]
    %v467 = vld [vmem:[#allocation2 + $0x1d8] sm:$0xff]
    %v468 = vld [vmem:[#allocation2 + $0x1e0] sm:$0xff]
    %v469 = vld [vmem:[#allocation2 + $0x1e8] sm:$0xff]
    %v470 = vld [vmem:[#allocation2 + $0x1f0] sm:$0xff]
    %v471 = vld [vmem:[#allocation2 + $0x1f8] sm:$0xff]
    %v472 = vld [vmem:[#allocation2 + $0x200] sm:$0xff]
    %v473 = vld [vmem:[%s4] sm:$0xff]
    %v474 = vld [vmem:[%s4 + $0x8] sm:$0x1f]
    %v477 = vperm.slane %v473, 0
    %v478 = vperm.slane %v473, 1
    %v479 = vperm.slane %v473, 2
    %v480 = vperm.slane %v473, 3
    %v481 = vperm.slane %v473, 4
    %v482 = vperm.slane %v473, 5
    %v483 = vperm.slane %v473, 6
    %v484 = vperm.slane %v473, 7
    %v485 = vperm.slane %v474, 0
    %v486 = vperm.slane %v474, 1
    %v487 = vperm.slane %v474, 2
    %v488 = vperm.slane %v474, 3
    %v489 = vperm.slane %v474, 4
    %vm503 = vcmask 326656
    %v505 = vsel %vm503, %v407, 0
    %507 = vmatpush.msra.mxu0 0.0
    %508 = vmatpush.msra.mxu0 0.0
    %509 = vmatpush.msra.mxu0 0.0
    %510 = vmatpush.msra.mxu0 0.0
    %511 = vmatpush.msra.mxu0 0.0
    %512 = vmatpush.msra.mxu0 0.0
    %513 = vmatpush.msra.mxu0 0.0
    %514 = vmatpush.msra.mxu0 0.0
    %515 = vmatpush.msra.mxu0 0.0
    %516 = vmatpush.msra.mxu0 0.0
    %517 = vmatpush.msra.mxu0 0.0
    %v518 = vand.u32 %v460, 4294901760
    %519 = vmatpush.msra.mxu0 %v518
    %v520 = vand.u32 %v447, 4294901760
    %521 = vmatpush.msra.mxu0 %v520
    %v522 = vand.u32 %v434, 4294901760
    %523 = vmatpush.msra.mxu0 %v522
    %v524 = vand.u32 %v421, 4294901760
    %525 = vmatpush.msra.mxu0 %v524
    %v526 = vand.u32 %v408, 4294901760
    %527 = vmatpush.msra.mxu0 %v526
    %v528 = vand.u32 %v505, 4294901760
    %v529 = vsub.f32 %v505, %v528
    %v530 = vand.u32 %v529, 4294901760
    %v531 = vsub.f32 %v529, %v530
    %v532 = vand.u32 %v531, 4294901760
    %533 = vmatmul.f32.gmra.mxu0 %v532
    %v534 = vpop.f32.mrf.mxu0
    %v535 = vadd.f32 %v477, %v534
    %536 = vdwg.mxu0
    %537 = vmatpush.msra.mxu0 0.0
    %538 = vmatpush.msra.mxu0 0.0
    %539 = vmatpush.msra.mxu0 0.0
    %540 = vmatpush.msra.mxu0 0.0
    %541 = vmatpush.msra.mxu0 0.0
    %542 = vmatpush.msra.mxu0 0.0
    %543 = vmatpush.msra.mxu0 0.0
    %544 = vmatpush.msra.mxu0 0.0
    %545 = vmatpush.msra.mxu0 0.0
    %546 = vmatpush.msra.mxu0 0.0
    %547 = vmatpush.msra.mxu0 0.0
    %v548 = vand.u32 %v460, 4294901760
    %v549 = vsub.f32 %v460, %v548
    %v550 = vand.u32 %v549, 4294901760
    %v551 = vsub.f32 %v549, %v550
    %v552 = vand.u32 %v551, 4294901760
    %553 = vmatpush.msra.mxu0 %v552
    %v554 = vand.u32 %v447, 4294901760
    %v555 = vsub.f32 %v447, %v554
    %v556 = vand.u32 %v555, 4294901760
    %v557 = vsub.f32 %v555, %v556
    %v558 = vand.u32 %v557, 4294901760
    %559 = vmatpush.msra.mxu0 %v558
    %v560 = vand.u32 %v434, 4294901760
    %v561 = vsub.f32 %v434, %v560
    %v562 = vand.u32 %v561, 4294901760
    %v563 = vsub.f32 %v561, %v562
    %v564 = vand.u32 %v563, 4294901760
    %565 = vmatpush.msra.mxu0 %v564
    %v566 = vand.u32 %v421, 4294901760
    %v567 = vsub.f32 %v421, %v566
    %v568 = vand.u32 %v567, 4294901760
    %v569 = vsub.f32 %v567, %v568
    %v570 = vand.u32 %v569, 4294901760
    %571 = vmatpush.msra.mxu0 %v570
    %v572 = vand.u32 %v408, 4294901760
    %v573 = vsub.f32 %v408, %v572
    %v574 = vand.u32 %v573, 4294901760
    %v575 = vsub.f32 %v573, %v574
    %v576 = vand.u32 %v575, 4294901760
    %577 = vmatpush.msra.mxu0 %v576
    %v578 = vand.u32 %v505, 4294901760
    %579 = vmatmul.f32.gmra.mxu0 %v578
    %v580 = vpop.f32.mrf.mxu0
    %v581 = vadd.f32 %v535, %v580
    %582 = vdwg.mxu0
    %583 = vmatpush.msra.mxu0 0.0
    %584 = vmatpush.msra.mxu0 0.0
    %585 = vmatpush.msra.mxu0 0.0
    %586 = vmatpush.msra.mxu0 0.0
    %587 = vmatpush.msra.mxu0 0.0
    %588 = vmatpush.msra.mxu0 0.0
    %589 = vmatpush.msra.mxu0 0.0
    %590 = vmatpush.msra.mxu0 0.0
    %591 = vmatpush.msra.mxu0 0.0
    %592 = vmatpush.msra.mxu0 0.0
    %593 = vmatpush.msra.mxu0 0.0
    %v594 = vand.u32 %v460, 4294901760
    %v595 = vsub.f32 %v460, %v594
    %596 = vmatpush.msra.mxu0 %v595
    %v597 = vand.u32 %v447, 4294901760
    %v598 = vsub.f32 %v447, %v597
    %599 = vmatpush.msra.mxu0 %v598
    %v600 = vand.u32 %v434, 4294901760
    %v601 = vsub.f32 %v434, %v600
    %602 = vmatpush.msra.mxu0 %v601
    %v603 = vand.u32 %v421, 4294901760
    %v604 = vsub.f32 %v421, %v603
    %605 = vmatpush.msra.mxu0 %v604
    %v606 = vand.u32 %v408, 4294901760
    %v607 = vsub.f32 %v408, %v606
    %608 = vmatpush.msra.mxu0 %v607
    %v609 = vand.u32 %v505, 4294901760
    %v610 = vsub.f32 %v505, %v609
    %611 = vmatmul.f32.gmra.mxu0 %v610
    %v612 = vpop.f32.mrf.mxu0
    %v613 = vadd.f32 %v581, %v612
    %614 = vdwg.mxu0
    %615 = vmatpush.msra.mxu0 0.0
    %616 = vmatpush.msra.mxu0 0.0
    %617 = vmatpush.msra.mxu0 0.0
    %618 = vmatpush.msra.mxu0 0.0
    %619 = vmatpush.msra.mxu0 0.0
    %620 = vmatpush.msra.mxu0 0.0
    %621 = vmatpush.msra.mxu0 0.0
    %622 = vmatpush.msra.mxu0 0.0
    %623 = vmatpush.msra.mxu0 0.0
    %624 = vmatpush.msra.mxu0 0.0
    %625 = vmatpush.msra.mxu0 0.0
    %v626 = vand.u32 %v460, 4294901760
    %627 = vmatpush.msra.mxu0 %v626
    %v628 = vand.u32 %v447, 4294901760
    %629 = vmatpush.msra.mxu0 %v628
    %v630 = vand.u32 %v434, 4294901760
    %631 = vmatpush.msra.mxu0 %v630
    %v632 = vand.u32 %v421, 4294901760
    %633 = vmatpush.msra.mxu0 %v632
    %v634 = vand.u32 %v408, 4294901760
    %635 = vmatpush.msra.mxu0 %v634
    %v636 = vand.u32 %v505, 4294901760
    %v637 = vsub.f32 %v505, %v636
    %v638 = vand.u32 %v637, 4294901760
    %639 = vmatmul.f32.gmra.mxu0 %v638
    %v640 = vpop.f32.mrf.mxu0
    %v641 = vadd.f32 %v613, %v640
    %642 = vdwg.mxu0
    %643 = vmatpush.msra.mxu0 0.0
    %644 = vmatpush.msra.mxu0 0.0
    %645 = vmatpush.msra.mxu0 0.0
    %646 = vmatpush.msra.mxu0 0.0
    %647 = vmatpush.msra.mxu0 0.0
    %648 = vmatpush.msra.mxu0 0.0
    %649 = vmatpush.msra.mxu0 0.0
    %650 = vmatpush.msra.mxu0 0.0
    %651 = vmatpush.msra.mxu0 0.0
    %652 = vmatpush.msra.mxu0 0.0
    %653 = vmatpush.msra.mxu0 0.0
    %v654 = vand.u32 %v460, 4294901760
    %v655 = vsub.f32 %v460, %v654
    %v656 = vand.u32 %v655, 4294901760
    %657 = vmatpush.msra.mxu0 %v656
    %v658 = vand.u32 %v447, 4294901760
    %v659 = vsub.f32 %v447, %v658
    %v660 = vand.u32 %v659, 4294901760
    %661 = vmatpush.msra.mxu0 %v660
    %v662 = vand.u32 %v434, 4294901760
    %v663 = vsub.f32 %v434, %v662
    %v664 = vand.u32 %v663, 4294901760
    %665 = vmatpush.msra.mxu0 %v664
    %v666 = vand.u32 %v421, 4294901760
    %v667 = vsub.f32 %v421, %v666
    %v668 = vand.u32 %v667, 4294901760
    %669 = vmatpush.msra.mxu0 %v668
    %v670 = vand.u32 %v408, 4294901760
    %v671 = vsub.f32 %v408, %v670
    %v672 = vand.u32 %v671, 4294901760
    %673 = vmatpush.msra.mxu0 %v672
    %v674 = vand.u32 %v505, 4294901760
    %675 = vmatmul.f32.gmra.mxu0 %v674
    %v676 = vpop.f32.mrf.mxu0
    %v677 = vadd.f32 %v641, %v676
    %678 = vdwg.mxu0
    %679 = vmatpush.msra.mxu0 0.0
    %680 = vmatpush.msra.mxu0 0.0
    %681 = vmatpush.msra.mxu0 0.0
    %682 = vmatpush.msra.mxu0 0.0
    %683 = vmatpush.msra.mxu0 0.0
    %684 = vmatpush.msra.mxu0 0.0
    %685 = vmatpush.msra.mxu0 0.0
    %686 = vmatpush.msra.mxu0 0.0
    %687 = vmatpush.msra.mxu0 0.0
    %688 = vmatpush.msra.mxu0 0.0
    %689 = vmatpush.msra.mxu0 0.0
    %v690 = vand.u32 %v460, 4294901760
    %691 = vmatpush.msra.mxu0 %v690
    %v692 = vand.u32 %v447, 4294901760
    %693 = vmatpush.msra.mxu0 %v692
    %v694 = vand.u32 %v434, 4294901760
    %695 = vmatpush.msra.mxu0 %v694
    %v696 = vand.u32 %v421, 4294901760
    %697 = vmatpush.msra.mxu0 %v696
    %v698 = vand.u32 %v408, 4294901760
    %699 = vmatpush.msra.mxu0 %v698
    %v700 = vand.u32 %v505, 4294901760
    %701 = vmatmul.f32.gmra.mxu0 %v700
    %v702 = vpop.f32.mrf.mxu0
    %v703 = vadd.f32 %v677, %v702
    %704 = vdwg.mxu0
    %705 = vmatpush.msra.mxu0 0.0
    %706 = vmatpush.msra.mxu0 0.0
    %707 = vmatpush.msra.mxu0 0.0
    %708 = vmatpush.msra.mxu0 0.0
    %709 = vmatpush.msra.mxu0 0.0
    %710 = vmatpush.msra.mxu0 0.0
    %711 = vmatpush.msra.mxu0 0.0
    %712 = vmatpush.msra.mxu0 0.0
    %713 = vmatpush.msra.mxu0 0.0
    %714 = vmatpush.msra.mxu0 0.0
    %715 = vmatpush.msra.mxu0 0.0
    %v716 = vand.u32 %v461, 4294901760
    %717 = vmatpush.msra.mxu0 %v716
    %v718 = vand.u32 %v448, 4294901760
    %719 = vmatpush.msra.mxu0 %v718
    %v720 = vand.u32 %v435, 4294901760
    %721 = vmatpush.msra.mxu0 %v720
    %v722 = vand.u32 %v422, 4294901760
    %723 = vmatpush.msra.mxu0 %v722
    %v724 = vand.u32 %v409, 4294901760
    %725 = vmatpush.msra.mxu0 %v724
    %v726 = vand.u32 %v505, 4294901760
    %v727 = vsub.f32 %v505, %v726
    %v728 = vand.u32 %v727, 4294901760
    %v729 = vsub.f32 %v727, %v728
    %v730 = vand.u32 %v729, 4294901760
    %731 = vmatmul.f32.gmra.mxu0 %v730
    %v732 = vpop.f32.mrf.mxu0
    %v733 = vadd.f32 %v478, %v732
    %734 = vdwg.mxu0
    %735 = vmatpush.msra.mxu0 0.0
    %736 = vmatpush.msra.mxu0 0.0
    %737 = vmatpush.msra.mxu0 0.0
    %738 = vmatpush.msra.mxu0 0.0
    %739 = vmatpush.msra.mxu0 0.0
    %740 = vmatpush.msra.mxu0 0.0
    %741 = vmatpush.msra.mxu0 0.0
    %742 = vmatpush.msra.mxu0 0.0
    %743 = vmatpush.msra.mxu0 0.0
    %744 = vmatpush.msra.mxu0 0.0
    %745 = vmatpush.msra.mxu0 0.0
    %v746 = vand.u32 %v461, 4294901760
    %v747 = vsub.f32 %v461, %v746
    %v748 = vand.u32 %v747, 4294901760
    %v749 = vsub.f32 %v747, %v748
    %v750 = vand.u32 %v749, 4294901760
    %751 = vmatpush.msra.mxu0 %v750
    %v752 = vand.u32 %v448, 4294901760
    %v753 = vsub.f32 %v448, %v752
    %v754 = vand.u32 %v753, 4294901760
    %v755 = vsub.f32 %v753, %v754
    %v756 = vand.u32 %v755, 4294901760
    %757 = vmatpush.msra.mxu0 %v756
    %v758 = vand.u32 %v435, 4294901760
    %v759 = vsub.f32 %v435, %v758
    %v760 = vand.u32 %v759, 4294901760
    %v761 = vsub.f32 %v759, %v760
    %v762 = vand.u32 %v761, 4294901760
    %763 = vmatpush.msra.mxu0 %v762
    %v764 = vand.u32 %v422, 4294901760
    %v765 = vsub.f32 %v422, %v764
    %v766 = vand.u32 %v765, 4294901760
    %v767 = vsub.f32 %v765, %v766
    %v768 = vand.u32 %v767, 4294901760
    %769 = vmatpush.msra.mxu0 %v768
    %v770 = vand.u32 %v409, 4294901760
    %v771 = vsub.f32 %v409, %v770
    %v772 = vand.u32 %v771, 4294901760
    %v773 = vsub.f32 %v771, %v772
    %v774 = vand.u32 %v773, 4294901760
    %775 = vmatpush.msra.mxu0 %v774
    %v776 = vand.u32 %v505, 4294901760
    %777 = vmatmul.f32.gmra.mxu0 %v776
    %v778 = vpop.f32.mrf.mxu0
    %v779 = vadd.f32 %v733, %v778
    %780 = vdwg.mxu0
    %781 = vmatpush.msra.mxu0 0.0
    %782 = vmatpush.msra.mxu0 0.0
    %783 = vmatpush.msra.mxu0 0.0
    %784 = vmatpush.msra.mxu0 0.0
    %785 = vmatpush.msra.mxu0 0.0
    %786 = vmatpush.msra.mxu0 0.0
    %787 = vmatpush.msra.mxu0 0.0
    %788 = vmatpush.msra.mxu0 0.0
    %789 = vmatpush.msra.mxu0 0.0
    %790 = vmatpush.msra.mxu0 0.0
    %791 = vmatpush.msra.mxu0 0.0
    %v792 = vand.u32 %v461, 4294901760
    %v793 = vsub.f32 %v461, %v792
    %794 = vmatpush.msra.mxu0 %v793
    %v795 = vand.u32 %v448, 4294901760
    %v796 = vsub.f32 %v448, %v795
    %797 = vmatpush.msra.mxu0 %v796
    %v798 = vand.u32 %v435, 4294901760
    %v799 = vsub.f32 %v435, %v798
    %800 = vmatpush.msra.mxu0 %v799
    %v801 = vand.u32 %v422, 4294901760
    %v802 = vsub.f32 %v422, %v801
    %803 = vmatpush.msra.mxu0 %v802
    %v804 = vand.u32 %v409, 4294901760
    %v805 = vsub.f32 %v409, %v804
    %806 = vmatpush.msra.mxu0 %v805
    %v807 = vand.u32 %v505, 4294901760
    %v808 = vsub.f32 %v505, %v807
    %809 = vmatmul.f32.gmra.mxu0 %v808
    %v810 = vpop.f32.mrf.mxu0
    %v811 = vadd.f32 %v779, %v810
    %812 = vdwg.mxu0
    %813 = vmatpush.msra.mxu0 0.0
    %814 = vmatpush.msra.mxu0 0.0
    %815 = vmatpush.msra.mxu0 0.0
    %816 = vmatpush.msra.mxu0 0.0
    %817 = vmatpush.msra.mxu0 0.0
    %818 = vmatpush.msra.mxu0 0.0
    %819 = vmatpush.msra.mxu0 0.0
    %820 = vmatpush.msra.mxu0 0.0
    %821 = vmatpush.msra.mxu0 0.0
    %822 = vmatpush.msra.mxu0 0.0
    %823 = vmatpush.msra.mxu0 0.0
    %v824 = vand.u32 %v461, 4294901760
    %825 = vmatpush.msra.mxu0 %v824
    %v826 = vand.u32 %v448, 4294901760
    %827 = vmatpush.msra.mxu0 %v826
    %v828 = vand.u32 %v435, 4294901760
    %829 = vmatpush.msra.mxu0 %v828
    %v830 = vand.u32 %v422, 4294901760
    %831 = vmatpush.msra.mxu0 %v830
    %v832 = vand.u32 %v409, 4294901760
    %833 = vmatpush.msra.mxu0 %v832
    %v834 = vand.u32 %v505, 4294901760
    %v835 = vsub.f32 %v505, %v834
    %v836 = vand.u32 %v835, 4294901760
    %837 = vmatmul.f32.gmra.mxu0 %v836
    %v838 = vpop.f32.mrf.mxu0
    %v839 = vadd.f32 %v811, %v838
    %840 = vdwg.mxu0
    %841 = vmatpush.msra.mxu0 0.0
    %842 = vmatpush.msra.mxu0 0.0
    %843 = vmatpush.msra.mxu0 0.0
    %844 = vmatpush.msra.mxu0 0.0
    %845 = vmatpush.msra.mxu0 0.0
    %846 = vmatpush.msra.mxu0 0.0
    %847 = vmatpush.msra.mxu0 0.0
    %848 = vmatpush.msra.mxu0 0.0
    %849 = vmatpush.msra.mxu0 0.0
    %850 = vmatpush.msra.mxu0 0.0
    %851 = vmatpush.msra.mxu0 0.0
    %v852 = vand.u32 %v461, 4294901760
    %v853 = vsub.f32 %v461, %v852
    %v854 = vand.u32 %v853, 4294901760
    %855 = vmatpush.msra.mxu0 %v854
    %v856 = vand.u32 %v448, 4294901760
    %v857 = vsub.f32 %v448, %v856
    %v858 = vand.u32 %v857, 4294901760
    %859 = vmatpush.msra.mxu0 %v858
    %v860 = vand.u32 %v435, 4294901760
    %v861 = vsub.f32 %v435, %v860
    %v862 = vand.u32 %v861, 4294901760
    %863 = vmatpush.msra.mxu0 %v862
    %v864 = vand.u32 %v422, 4294901760
    %v865 = vsub.f32 %v422, %v864
    %v866 = vand.u32 %v865, 4294901760
    %867 = vmatpush.msra.mxu0 %v866
    %v868 = vand.u32 %v409, 4294901760
    %v869 = vsub.f32 %v409, %v868
    %v870 = vand.u32 %v869, 4294901760
    %871 = vmatpush.msra.mxu0 %v870
    %v872 = vand.u32 %v505, 4294901760
    %873 = vmatmul.f32.gmra.mxu0 %v872
    %v874 = vpop.f32.mrf.mxu0
    %v875 = vadd.f32 %v839, %v874
    %876 = vdwg.mxu0
    %877 = vmatpush.msra.mxu0 0.0
    %878 = vmatpush.msra.mxu0 0.0
    %879 = vmatpush.msra.mxu0 0.0
    %880 = vmatpush.msra.mxu0 0.0
    %881 = vmatpush.msra.mxu0 0.0
    %882 = vmatpush.msra.mxu0 0.0
    %883 = vmatpush.msra.mxu0 0.0
    %884 = vmatpush.msra.mxu0 0.0
    %885 = vmatpush.msra.mxu0 0.0
    %886 = vmatpush.msra.mxu0 0.0
    %887 = vmatpush.msra.mxu0 0.0
    %v888 = vand.u32 %v461, 4294901760
    %889 = vmatpush.msra.mxu0 %v888
    %v890 = vand.u32 %v448, 4294901760
    %891 = vmatpush.msra.mxu0 %v890
    %v892 = vand.u32 %v435, 4294901760
    %893 = vmatpush.msra.mxu0 %v892
    %v894 = vand.u32 %v422, 4294901760
    %895 = vmatpush.msra.mxu0 %v894
    %v896 = vand.u32 %v409, 4294901760
    %897 = vmatpush.msra.mxu0 %v896
    %v898 = vand.u32 %v505, 4294901760
    %899 = vmatmul.f32.gmra.mxu0 %v898
    %v900 = vpop.f32.mrf.mxu0
    %v901 = vadd.f32 %v875, %v900
    %902 = vdwg.mxu0
    %903 = vmatpush.msra.mxu0 0.0
    %904 = vmatpush.msra.mxu0 0.0
    %905 = vmatpush.msra.mxu0 0.0
    %906 = vmatpush.msra.mxu0 0.0
    %907 = vmatpush.msra.mxu0 0.0
    %908 = vmatpush.msra.mxu0 0.0
    %909 = vmatpush.msra.mxu0 0.0
    %910 = vmatpush.msra.mxu0 0.0
    %911 = vmatpush.msra.mxu0 0.0
    %912 = vmatpush.msra.mxu0 0.0
    %913 = vmatpush.msra.mxu0 0.0
    %v914 = vand.u32 %v462, 4294901760
    %915 = vmatpush.msra.mxu0 %v914
    %v916 = vand.u32 %v449, 4294901760
    %917 = vmatpush.msra.mxu0 %v916
    %v918 = vand.u32 %v436, 4294901760
    %919 = vmatpush.msra.mxu0 %v918
    %v920 = vand.u32 %v423, 4294901760
    %921 = vmatpush.msra.mxu0 %v920
    %v922 = vand.u32 %v410, 4294901760
    %923 = vmatpush.msra.mxu0 %v922
    %v924 = vand.u32 %v505, 4294901760
    %v925 = vsub.f32 %v505, %v924
    %v926 = vand.u32 %v925, 4294901760
    %v927 = vsub.f32 %v925, %v926
    %v928 = vand.u32 %v927, 4294901760
    %929 = vmatmul.f32.gmra.mxu0 %v928
    %v930 = vpop.f32.mrf.mxu0
    %v931 = vadd.f32 %v479, %v930
    %932 = vdwg.mxu0
    %933 = vmatpush.msra.mxu0 0.0
    %934 = vmatpush.msra.mxu0 0.0
    %935 = vmatpush.msra.mxu0 0.0
    %936 = vmatpush.msra.mxu0 0.0
    %937 = vmatpush.msra.mxu0 0.0
    %938 = vmatpush.msra.mxu0 0.0
    %939 = vmatpush.msra.mxu0 0.0
    %940 = vmatpush.msra.mxu0 0.0
    %941 = vmatpush.msra.mxu0 0.0
    %942 = vmatpush.msra.mxu0 0.0
    %943 = vmatpush.msra.mxu0 0.0
    %v944 = vand.u32 %v462, 4294901760
    %v945 = vsub.f32 %v462, %v944
    %v946 = vand.u32 %v945, 4294901760
    %v947 = vsub.f32 %v945, %v946
    %v948 = vand.u32 %v947, 4294901760
    %949 = vmatpush.msra.mxu0 %v948
    %v950 = vand.u32 %v449, 4294901760
    %v951 = vsub.f32 %v449, %v950
    %v952 = vand.u32 %v951, 4294901760
    %v953 = vsub.f32 %v951, %v952
    %v954 = vand.u32 %v953, 4294901760
    %955 = vmatpush.msra.mxu0 %v954
    %v956 = vand.u32 %v436, 4294901760
    %v957 = vsub.f32 %v436, %v956
    %v958 = vand.u32 %v957, 4294901760
    %v959 = vsub.f32 %v957, %v958
    %v960 = vand.u32 %v959, 4294901760
    %961 = vmatpush.msra.mxu0 %v960
    %v962 = vand.u32 %v423, 4294901760
    %v963 = vsub.f32 %v423, %v962
    %v964 = vand.u32 %v963, 4294901760
    %v965 = vsub.f32 %v963, %v964
    %v966 = vand.u32 %v965, 4294901760
    %967 = vmatpush.msra.mxu0 %v966
    %v968 = vand.u32 %v410, 4294901760
    %v969 = vsub.f32 %v410, %v968
    %v970 = vand.u32 %v969, 4294901760
    %v971 = vsub.f32 %v969, %v970
    %v972 = vand.u32 %v971, 4294901760
    %973 = vmatpush.msra.mxu0 %v972
    %v974 = vand.u32 %v505, 4294901760
    %975 = vmatmul.f32.gmra.mxu0 %v974
    %v976 = vpop.f32.mrf.mxu0
    %v977 = vadd.f32 %v931, %v976
    %978 = vdwg.mxu0
    %979 = vmatpush.msra.mxu0 0.0
    %980 = vmatpush.msra.mxu0 0.0
    %981 = vmatpush.msra.mxu0 0.0
    %982 = vmatpush.msra.mxu0 0.0
    %983 = vmatpush.msra.mxu0 0.0
    %984 = vmatpush.msra.mxu0 0.0
    %985 = vmatpush.msra.mxu0 0.0
    %986 = vmatpush.msra.mxu0 0.0
    %987 = vmatpush.msra.mxu0 0.0
    %988 = vmatpush.msra.mxu0 0.0
    %989 = vmatpush.msra.mxu0 0.0
    %v990 = vand.u32 %v462, 4294901760
    %v991 = vsub.f32 %v462, %v990
    %992 = vmatpush.msra.mxu0 %v991
    %v993 = vand.u32 %v449, 4294901760
    %v994 = vsub.f32 %v449, %v993
    %995 = vmatpush.msra.mxu0 %v994
    %v996 = vand.u32 %v436, 4294901760
    %v997 = vsub.f32 %v436, %v996
    %998 = vmatpush.msra.mxu0 %v997
    %v999 = vand.u32 %v423, 4294901760
    %v1000 = vsub.f32 %v423, %v999
    %1001 = vmatpush.msra.mxu0 %v1000
    %v1002 = vand.u32 %v410, 4294901760
    %v1003 = vsub.f32 %v410, %v1002
    %1004 = vmatpush.msra.mxu0 %v1003
    %v1005 = vand.u32 %v505, 4294901760
    %v1006 = vsub.f32 %v505, %v1005
    %1007 = vmatmul.f32.gmra.mxu0 %v1006
    %v1008 = vpop.f32.mrf.mxu0
    %v1009 = vadd.f32 %v977, %v1008
    %1010 = vdwg.mxu0
    %1011 = vmatpush.msra.mxu0 0.0
    %1012 = vmatpush.msra.mxu0 0.0
    %1013 = vmatpush.msra.mxu0 0.0
    %1014 = vmatpush.msra.mxu0 0.0
    %1015 = vmatpush.msra.mxu0 0.0
    %1016 = vmatpush.msra.mxu0 0.0
    %1017 = vmatpush.msra.mxu0 0.0
    %1018 = vmatpush.msra.mxu0 0.0
    %1019 = vmatpush.msra.mxu0 0.0
    %1020 = vmatpush.msra.mxu0 0.0
    %1021 = vmatpush.msra.mxu0 0.0
    %v1022 = vand.u32 %v462, 4294901760
    %1023 = vmatpush.msra.mxu0 %v1022
    %v1024 = vand.u32 %v449, 4294901760
    %1025 = vmatpush.msra.mxu0 %v1024
    %v1026 = vand.u32 %v436, 4294901760
    %1027 = vmatpush.msra.mxu0 %v1026
    %v1028 = vand.u32 %v423, 4294901760
    %1029 = vmatpush.msra.mxu0 %v1028
    %v1030 = vand.u32 %v410, 4294901760
    %1031 = vmatpush.msra.mxu0 %v1030
    %v1032 = vand.u32 %v505, 4294901760
    %v1033 = vsub.f32 %v505, %v1032
    %v1034 = vand.u32 %v1033, 4294901760
    %1035 = vmatmul.f32.gmra.mxu0 %v1034
    %v1036 = vpop.f32.mrf.mxu0
    %v1037 = vadd.f32 %v1009, %v1036
    %1038 = vdwg.mxu0
    %1039 = vmatpush.msra.mxu0 0.0
    %1040 = vmatpush.msra.mxu0 0.0
    %1041 = vmatpush.msra.mxu0 0.0
    %1042 = vmatpush.msra.mxu0 0.0
    %1043 = vmatpush.msra.mxu0 0.0
    %1044 = vmatpush.msra.mxu0 0.0
    %1045 = vmatpush.msra.mxu0 0.0
    %1046 = vmatpush.msra.mxu0 0.0
    %1047 = vmatpush.msra.mxu0 0.0
    %1048 = vmatpush.msra.mxu0 0.0
    %1049 = vmatpush.msra.mxu0 0.0
    %v1050 = vand.u32 %v462, 4294901760
    %v1051 = vsub.f32 %v462, %v1050
    %v1052 = vand.u32 %v1051, 4294901760
    %1053 = vmatpush.msra.mxu0 %v1052
    %v1054 = vand.u32 %v449, 4294901760
    %v1055 = vsub.f32 %v449, %v1054
    %v1056 = vand.u32 %v1055, 4294901760
    %1057 = vmatpush.msra.mxu0 %v1056
    %v1058 = vand.u32 %v436, 4294901760
    %v1059 = vsub.f32 %v436, %v1058
    %v1060 = vand.u32 %v1059, 4294901760
    %1061 = vmatpush.msra.mxu0 %v1060
    %v1062 = vand.u32 %v423, 4294901760
    %v1063 = vsub.f32 %v423, %v1062
    %v1064 = vand.u32 %v1063, 4294901760
    %1065 = vmatpush.msra.mxu0 %v1064
    %v1066 = vand.u32 %v410, 4294901760
    %v1067 = vsub.f32 %v410, %v1066
    %v1068 = vand.u32 %v1067, 4294901760
    %1069 = vmatpush.msra.mxu0 %v1068
    %v1070 = vand.u32 %v505, 4294901760
    %1071 = vmatmul.f32.gmra.mxu0 %v1070
    %v1072 = vpop.f32.mrf.mxu0
    %v1073 = vadd.f32 %v1037, %v1072
    %1074 = vdwg.mxu0
    %1075 = vmatpush.msra.mxu0 0.0
    %1076 = vmatpush.msra.mxu0 0.0
    %1077 = vmatpush.msra.mxu0 0.0
    %1078 = vmatpush.msra.mxu0 0.0
    %1079 = vmatpush.msra.mxu0 0.0
    %1080 = vmatpush.msra.mxu0 0.0
    %1081 = vmatpush.msra.mxu0 0.0
    %1082 = vmatpush.msra.mxu0 0.0
    %1083 = vmatpush.msra.mxu0 0.0
    %1084 = vmatpush.msra.mxu0 0.0
    %1085 = vmatpush.msra.mxu0 0.0
    %v1086 = vand.u32 %v462, 4294901760
    %1087 = vmatpush.msra.mxu0 %v1086
    %v1088 = vand.u32 %v449, 4294901760
    %1089 = vmatpush.msra.mxu0 %v1088
    %v1090 = vand.u32 %v436, 4294901760
    %1091 = vmatpush.msra.mxu0 %v1090
    %v1092 = vand.u32 %v423, 4294901760
    %1093 = vmatpush.msra.mxu0 %v1092
    %v1094 = vand.u32 %v410, 4294901760
    %1095 = vmatpush.msra.mxu0 %v1094
    %v1096 = vand.u32 %v505, 4294901760
    %1097 = vmatmul.f32.gmra.mxu0 %v1096
    %v1098 = vpop.f32.mrf.mxu0
    %v1099 = vadd.f32 %v1073, %v1098
    %1100 = vdwg.mxu0
    %1101 = vmatpush.msra.mxu0 0.0
    %1102 = vmatpush.msra.mxu0 0.0
    %1103 = vmatpush.msra.mxu0 0.0
    %1104 = vmatpush.msra.mxu0 0.0
    %1105 = vmatpush.msra.mxu0 0.0
    %1106 = vmatpush.msra.mxu0 0.0
    %1107 = vmatpush.msra.mxu0 0.0
    %1108 = vmatpush.msra.mxu0 0.0
    %1109 = vmatpush.msra.mxu0 0.0
    %1110 = vmatpush.msra.mxu0 0.0
    %1111 = vmatpush.msra.mxu0 0.0
    %v1112 = vand.u32 %v463, 4294901760
    %1113 = vmatpush.msra.mxu0 %v1112
    %v1114 = vand.u32 %v450, 4294901760
    %1115 = vmatpush.msra.mxu0 %v1114
    %v1116 = vand.u32 %v437, 4294901760
    %1117 = vmatpush.msra.mxu0 %v1116
    %v1118 = vand.u32 %v424, 4294901760
    %1119 = vmatpush.msra.mxu0 %v1118
    %v1120 = vand.u32 %v411, 4294901760
    %1121 = vmatpush.msra.mxu0 %v1120
    %v1122 = vand.u32 %v505, 4294901760
    %v1123 = vsub.f32 %v505, %v1122
    %v1124 = vand.u32 %v1123, 4294901760
    %v1125 = vsub.f32 %v1123, %v1124
    %v1126 = vand.u32 %v1125, 4294901760
    %1127 = vmatmul.f32.gmra.mxu0 %v1126
    %v1128 = vpop.f32.mrf.mxu0
    %v1129 = vadd.f32 %v480, %v1128
    %1130 = vdwg.mxu0
    %1131 = vmatpush.msra.mxu0 0.0
    %1132 = vmatpush.msra.mxu0 0.0
    %1133 = vmatpush.msra.mxu0 0.0
    %1134 = vmatpush.msra.mxu0 0.0
    %1135 = vmatpush.msra.mxu0 0.0
    %1136 = vmatpush.msra.mxu0 0.0
    %1137 = vmatpush.msra.mxu0 0.0
    %1138 = vmatpush.msra.mxu0 0.0
    %1139 = vmatpush.msra.mxu0 0.0
    %1140 = vmatpush.msra.mxu0 0.0
    %1141 = vmatpush.msra.mxu0 0.0
    %v1142 = vand.u32 %v463, 4294901760
    %v1143 = vsub.f32 %v463, %v1142
    %v1144 = vand.u32 %v1143, 4294901760
    %v1145 = vsub.f32 %v1143, %v1144
    %v1146 = vand.u32 %v1145, 4294901760
    %1147 = vmatpush.msra.mxu0 %v1146
    %v1148 = vand.u32 %v450, 4294901760
    %v1149 = vsub.f32 %v450, %v1148
    %v1150 = vand.u32 %v1149, 4294901760
    %v1151 = vsub.f32 %v1149, %v1150
    %v1152 = vand.u32 %v1151, 4294901760
    %1153 = vmatpush.msra.mxu0 %v1152
    %v1154 = vand.u32 %v437, 4294901760
    %v1155 = vsub.f32 %v437, %v1154
    %v1156 = vand.u32 %v1155, 4294901760
    %v1157 = vsub.f32 %v1155, %v1156
    %v1158 = vand.u32 %v1157, 4294901760
    %1159 = vmatpush.msra.mxu0 %v1158
    %v1160 = vand.u32 %v424, 4294901760
    %v1161 = vsub.f32 %v424, %v1160
    %v1162 = vand.u32 %v1161, 4294901760
    %v1163 = vsub.f32 %v1161, %v1162
    %v1164 = vand.u32 %v1163, 4294901760
    %1165 = vmatpush.msra.mxu0 %v1164
    %v1166 = vand.u32 %v411, 4294901760
    %v1167 = vsub.f32 %v411, %v1166
    %v1168 = vand.u32 %v1167, 4294901760
    %v1169 = vsub.f32 %v1167, %v1168
    %v1170 = vand.u32 %v1169, 4294901760
    %1171 = vmatpush.msra.mxu0 %v1170
    %v1172 = vand.u32 %v505, 4294901760
    %1173 = vmatmul.f32.gmra.mxu0 %v1172
    %v1174 = vpop.f32.mrf.mxu0
    %v1175 = vadd.f32 %v1129, %v1174
    %1176 = vdwg.mxu0
    %1177 = vmatpush.msra.mxu0 0.0
    %1178 = vmatpush.msra.mxu0 0.0
    %1179 = vmatpush.msra.mxu0 0.0
    %1180 = vmatpush.msra.mxu0 0.0
    %1181 = vmatpush.msra.mxu0 0.0
    %1182 = vmatpush.msra.mxu0 0.0
    %1183 = vmatpush.msra.mxu0 0.0
    %1184 = vmatpush.msra.mxu0 0.0
    %1185 = vmatpush.msra.mxu0 0.0
    %1186 = vmatpush.msra.mxu0 0.0
    %1187 = vmatpush.msra.mxu0 0.0
    %v1188 = vand.u32 %v463, 4294901760
    %v1189 = vsub.f32 %v463, %v1188
    %1190 = vmatpush.msra.mxu0 %v1189
    %v1191 = vand.u32 %v450, 4294901760
    %v1192 = vsub.f32 %v450, %v1191
    %1193 = vmatpush.msra.mxu0 %v1192
    %v1194 = vand.u32 %v437, 4294901760
    %v1195 = vsub.f32 %v437, %v1194
    %1196 = vmatpush.msra.mxu0 %v1195
    %v1197 = vand.u32 %v424, 4294901760
    %v1198 = vsub.f32 %v424, %v1197
    %1199 = vmatpush.msra.mxu0 %v1198
    %v1200 = vand.u32 %v411, 4294901760
    %v1201 = vsub.f32 %v411, %v1200
    %1202 = vmatpush.msra.mxu0 %v1201
    %v1203 = vand.u32 %v505, 4294901760
    %v1204 = vsub.f32 %v505, %v1203
    %1205 = vmatmul.f32.gmra.mxu0 %v1204
    %v1206 = vpop.f32.mrf.mxu0
    %v1207 = vadd.f32 %v1175, %v1206
    %1208 = vdwg.mxu0
    %1209 = vmatpush.msra.mxu0 0.0
    %1210 = vmatpush.msra.mxu0 0.0
    %1211 = vmatpush.msra.mxu0 0.0
    %1212 = vmatpush.msra.mxu0 0.0
    %1213 = vmatpush.msra.mxu0 0.0
    %1214 = vmatpush.msra.mxu0 0.0
    %1215 = vmatpush.msra.mxu0 0.0
    %1216 = vmatpush.msra.mxu0 0.0
    %1217 = vmatpush.msra.mxu0 0.0
    %1218 = vmatpush.msra.mxu0 0.0
    %1219 = vmatpush.msra.mxu0 0.0
    %v1220 = vand.u32 %v463, 4294901760
    %1221 = vmatpush.msra.mxu0 %v1220
    %v1222 = vand.u32 %v450, 4294901760
    %1223 = vmatpush.msra.mxu0 %v1222
    %v1224 = vand.u32 %v437, 4294901760
    %1225 = vmatpush.msra.mxu0 %v1224
    %v1226 = vand.u32 %v424, 4294901760
    %1227 = vmatpush.msra.mxu0 %v1226
    %v1228 = vand.u32 %v411, 4294901760
    %1229 = vmatpush.msra.mxu0 %v1228
    %v1230 = vand.u32 %v505, 4294901760
    %v1231 = vsub.f32 %v505, %v1230
    %v1232 = vand.u32 %v1231, 4294901760
    %1233 = vmatmul.f32.gmra.mxu0 %v1232
    %v1234 = vpop.f32.mrf.mxu0
    %v1235 = vadd.f32 %v1207, %v1234
    %1236 = vdwg.mxu0
    %1237 = vmatpush.msra.mxu0 0.0
    %1238 = vmatpush.msra.mxu0 0.0
    %1239 = vmatpush.msra.mxu0 0.0
    %1240 = vmatpush.msra.mxu0 0.0
    %1241 = vmatpush.msra.mxu0 0.0
    %1242 = vmatpush.msra.mxu0 0.0
    %1243 = vmatpush.msra.mxu0 0.0
    %1244 = vmatpush.msra.mxu0 0.0
    %1245 = vmatpush.msra.mxu0 0.0
    %1246 = vmatpush.msra.mxu0 0.0
    %1247 = vmatpush.msra.mxu0 0.0
    %v1248 = vand.u32 %v463, 4294901760
    %v1249 = vsub.f32 %v463, %v1248
    %v1250 = vand.u32 %v1249, 4294901760
    %1251 = vmatpush.msra.mxu0 %v1250
    %v1252 = vand.u32 %v450, 4294901760
    %v1253 = vsub.f32 %v450, %v1252
    %v1254 = vand.u32 %v1253, 4294901760
    %1255 = vmatpush.msra.mxu0 %v1254
    %v1256 = vand.u32 %v437, 4294901760
    %v1257 = vsub.f32 %v437, %v1256
    %v1258 = vand.u32 %v1257, 4294901760
    %1259 = vmatpush.msra.mxu0 %v1258
    %v1260 = vand.u32 %v424, 4294901760
    %v1261 = vsub.f32 %v424, %v1260
    %v1262 = vand.u32 %v1261, 4294901760
    %1263 = vmatpush.msra.mxu0 %v1262
    %v1264 = vand.u32 %v411, 4294901760
    %v1265 = vsub.f32 %v411, %v1264
    %v1266 = vand.u32 %v1265, 4294901760
    %1267 = vmatpush.msra.mxu0 %v1266
    %v1268 = vand.u32 %v505, 4294901760
    %1269 = vmatmul.f32.gmra.mxu0 %v1268
    %v1270 = vpop.f32.mrf.mxu0
    %v1271 = vadd.f32 %v1235, %v1270
    %1272 = vdwg.mxu0
    %1273 = vmatpush.msra.mxu0 0.0
    %1274 = vmatpush.msra.mxu0 0.0
    %1275 = vmatpush.msra.mxu0 0.0
    %1276 = vmatpush.msra.mxu0 0.0
    %1277 = vmatpush.msra.mxu0 0.0
    %1278 = vmatpush.msra.mxu0 0.0
    %1279 = vmatpush.msra.mxu0 0.0
    %1280 = vmatpush.msra.mxu0 0.0
    %1281 = vmatpush.msra.mxu0 0.0
    %1282 = vmatpush.msra.mxu0 0.0
    %1283 = vmatpush.msra.mxu0 0.0
    %v1284 = vand.u32 %v463, 4294901760
    %1285 = vmatpush.msra.mxu0 %v1284
    %v1286 = vand.u32 %v450, 4294901760
    %1287 = vmatpush.msra.mxu0 %v1286
    %v1288 = vand.u32 %v437, 4294901760
    %1289 = vmatpush.msra.mxu0 %v1288
    %v1290 = vand.u32 %v424, 4294901760
    %1291 = vmatpush.msra.mxu0 %v1290
    %v1292 = vand.u32 %v411, 4294901760
    %1293 = vmatpush.msra.mxu0 %v1292
    %v1294 = vand.u32 %v505, 4294901760
    %1295 = vmatmul.f32.gmra.mxu0 %v1294
    %v1296 = vpop.f32.mrf.mxu0
    %v1297 = vadd.f32 %v1271, %v1296
    %1298 = vdwg.mxu0
    %1299 = vmatpush.msra.mxu0 0.0
    %1300 = vmatpush.msra.mxu0 0.0
    %1301 = vmatpush.msra.mxu0 0.0
    %1302 = vmatpush.msra.mxu0 0.0
    %1303 = vmatpush.msra.mxu0 0.0
    %1304 = vmatpush.msra.mxu0 0.0
    %1305 = vmatpush.msra.mxu0 0.0
    %1306 = vmatpush.msra.mxu0 0.0
    %1307 = vmatpush.msra.mxu0 0.0
    %1308 = vmatpush.msra.mxu0 0.0
    %1309 = vmatpush.msra.mxu0 0.0
    %v1310 = vand.u32 %v464, 4294901760
    %1311 = vmatpush.msra.mxu0 %v1310
    %v1312 = vand.u32 %v451, 4294901760
    %1313 = vmatpush.msra.mxu0 %v1312
    %v1314 = vand.u32 %v438, 4294901760
    %1315 = vmatpush.msra.mxu0 %v1314
    %v1316 = vand.u32 %v425, 4294901760
    %1317 = vmatpush.msra.mxu0 %v1316
    %v1318 = vand.u32 %v412, 4294901760
    %1319 = vmatpush.msra.mxu0 %v1318
    %v1320 = vand.u32 %v505, 4294901760
    %v1321 = vsub.f32 %v505, %v1320
    %v1322 = vand.u32 %v1321, 4294901760
    %v1323 = vsub.f32 %v1321, %v1322
    %v1324 = vand.u32 %v1323, 4294901760
    %1325 = vmatmul.f32.gmra.mxu0 %v1324
    %v1326 = vpop.f32.mrf.mxu0
    %v1327 = vadd.f32 %v481, %v1326
    %1328 = vdwg.mxu0
    %1329 = vmatpush.msra.mxu0 0.0
    %1330 = vmatpush.msra.mxu0 0.0
    %1331 = vmatpush.msra.mxu0 0.0
    %1332 = vmatpush.msra.mxu0 0.0
    %1333 = vmatpush.msra.mxu0 0.0
    %1334 = vmatpush.msra.mxu0 0.0
    %1335 = vmatpush.msra.mxu0 0.0
    %1336 = vmatpush.msra.mxu0 0.0
    %1337 = vmatpush.msra.mxu0 0.0
    %1338 = vmatpush.msra.mxu0 0.0
    %1339 = vmatpush.msra.mxu0 0.0
    %v1340 = vand.u32 %v464, 4294901760
    %v1341 = vsub.f32 %v464, %v1340
    %v1342 = vand.u32 %v1341, 4294901760
    %v1343 = vsub.f32 %v1341, %v1342
    %v1344 = vand.u32 %v1343, 4294901760
    %1345 = vmatpush.msra.mxu0 %v1344
    %v1346 = vand.u32 %v451, 4294901760
    %v1347 = vsub.f32 %v451, %v1346
    %v1348 = vand.u32 %v1347, 4294901760
    %v1349 = vsub.f32 %v1347, %v1348
    %v1350 = vand.u32 %v1349, 4294901760
    %1351 = vmatpush.msra.mxu0 %v1350
    %v1352 = vand.u32 %v438, 4294901760
    %v1353 = vsub.f32 %v438, %v1352
    %v1354 = vand.u32 %v1353, 4294901760
    %v1355 = vsub.f32 %v1353, %v1354
    %v1356 = vand.u32 %v1355, 4294901760
    %1357 = vmatpush.msra.mxu0 %v1356
    %v1358 = vand.u32 %v425, 4294901760
    %v1359 = vsub.f32 %v425, %v1358
    %v1360 = vand.u32 %v1359, 4294901760
    %v1361 = vsub.f32 %v1359, %v1360
    %v1362 = vand.u32 %v1361, 4294901760
    %1363 = vmatpush.msra.mxu0 %v1362
    %v1364 = vand.u32 %v412, 4294901760
    %v1365 = vsub.f32 %v412, %v1364
    %v1366 = vand.u32 %v1365, 4294901760
    %v1367 = vsub.f32 %v1365, %v1366
    %v1368 = vand.u32 %v1367, 4294901760
    %1369 = vmatpush.msra.mxu0 %v1368
    %v1370 = vand.u32 %v505, 4294901760
    %1371 = vmatmul.f32.gmra.mxu0 %v1370
    %v1372 = vpop.f32.mrf.mxu0
    %v1373 = vadd.f32 %v1327, %v1372
    %1374 = vdwg.mxu0
    %1375 = vmatpush.msra.mxu0 0.0
    %1376 = vmatpush.msra.mxu0 0.0
    %1377 = vmatpush.msra.mxu0 0.0
    %1378 = vmatpush.msra.mxu0 0.0
    %1379 = vmatpush.msra.mxu0 0.0
    %1380 = vmatpush.msra.mxu0 0.0
    %1381 = vmatpush.msra.mxu0 0.0
    %1382 = vmatpush.msra.mxu0 0.0
    %1383 = vmatpush.msra.mxu0 0.0
    %1384 = vmatpush.msra.mxu0 0.0
    %1385 = vmatpush.msra.mxu0 0.0
    %v1386 = vand.u32 %v464, 4294901760
    %v1387 = vsub.f32 %v464, %v1386
    %1388 = vmatpush.msra.mxu0 %v1387
    %v1389 = vand.u32 %v451, 4294901760
    %v1390 = vsub.f32 %v451, %v1389
    %1391 = vmatpush.msra.mxu0 %v1390
    %v1392 = vand.u32 %v438, 4294901760
    %v1393 = vsub.f32 %v438, %v1392
    %1394 = vmatpush.msra.mxu0 %v1393
    %v1395 = vand.u32 %v425, 4294901760
    %v1396 = vsub.f32 %v425, %v1395
    %1397 = vmatpush.msra.mxu0 %v1396
    %v1398 = vand.u32 %v412, 4294901760
    %v1399 = vsub.f32 %v412, %v1398
    %1400 = vmatpush.msra.mxu0 %v1399
    %v1401 = vand.u32 %v505, 4294901760
    %v1402 = vsub.f32 %v505, %v1401
    %1403 = vmatmul.f32.gmra.mxu0 %v1402
    %v1404 = vpop.f32.mrf.mxu0
    %v1405 = vadd.f32 %v1373, %v1404
    %1406 = vdwg.mxu0
    %1407 = vmatpush.msra.mxu0 0.0
    %1408 = vmatpush.msra.mxu0 0.0
    %1409 = vmatpush.msra.mxu0 0.0
    %1410 = vmatpush.msra.mxu0 0.0
    %1411 = vmatpush.msra.mxu0 0.0
    %1412 = vmatpush.msra.mxu0 0.0
    %1413 = vmatpush.msra.mxu0 0.0
    %1414 = vmatpush.msra.mxu0 0.0
    %1415 = vmatpush.msra.mxu0 0.0
    %1416 = vmatpush.msra.mxu0 0.0
    %1417 = vmatpush.msra.mxu0 0.0
    %v1418 = vand.u32 %v464, 4294901760
    %1419 = vmatpush.msra.mxu0 %v1418
    %v1420 = vand.u32 %v451, 4294901760
    %1421 = vmatpush.msra.mxu0 %v1420
    %v1422 = vand.u32 %v438, 4294901760
    %1423 = vmatpush.msra.mxu0 %v1422
    %v1424 = vand.u32 %v425, 4294901760
    %1425 = vmatpush.msra.mxu0 %v1424
    %v1426 = vand.u32 %v412, 4294901760
    %1427 = vmatpush.msra.mxu0 %v1426
    %v1428 = vand.u32 %v505, 4294901760
    %v1429 = vsub.f32 %v505, %v1428
    %v1430 = vand.u32 %v1429, 4294901760
    %1431 = vmatmul.f32.gmra.mxu0 %v1430
    %v1432 = vpop.f32.mrf.mxu0
    %v1433 = vadd.f32 %v1405, %v1432
    %1434 = vdwg.mxu0
    %1435 = vmatpush.msra.mxu0 0.0
    %1436 = vmatpush.msra.mxu0 0.0
    %1437 = vmatpush.msra.mxu0 0.0
    %1438 = vmatpush.msra.mxu0 0.0
    %1439 = vmatpush.msra.mxu0 0.0
    %1440 = vmatpush.msra.mxu0 0.0
    %1441 = vmatpush.msra.mxu0 0.0
    %1442 = vmatpush.msra.mxu0 0.0
    %1443 = vmatpush.msra.mxu0 0.0
    %1444 = vmatpush.msra.mxu0 0.0
    %1445 = vmatpush.msra.mxu0 0.0
    %v1446 = vand.u32 %v464, 4294901760
    %v1447 = vsub.f32 %v464, %v1446
    %v1448 = vand.u32 %v1447, 4294901760
    %1449 = vmatpush.msra.mxu0 %v1448
    %v1450 = vand.u32 %v451, 4294901760
    %v1451 = vsub.f32 %v451, %v1450
    %v1452 = vand.u32 %v1451, 4294901760
    %1453 = vmatpush.msra.mxu0 %v1452
    %v1454 = vand.u32 %v438, 4294901760
    %v1455 = vsub.f32 %v438, %v1454
    %v1456 = vand.u32 %v1455, 4294901760
    %1457 = vmatpush.msra.mxu0 %v1456
    %v1458 = vand.u32 %v425, 4294901760
    %v1459 = vsub.f32 %v425, %v1458
    %v1460 = vand.u32 %v1459, 4294901760
    %1461 = vmatpush.msra.mxu0 %v1460
    %v1462 = vand.u32 %v412, 4294901760
    %v1463 = vsub.f32 %v412, %v1462
    %v1464 = vand.u32 %v1463, 4294901760
    %1465 = vmatpush.msra.mxu0 %v1464
    %v1466 = vand.u32 %v505, 4294901760
    %1467 = vmatmul.f32.gmra.mxu0 %v1466
    %v1468 = vpop.f32.mrf.mxu0
    %v1469 = vadd.f32 %v1433, %v1468
    %1470 = vdwg.mxu0
    %1471 = vmatpush.msra.mxu0 0.0
    %1472 = vmatpush.msra.mxu0 0.0
    %1473 = vmatpush.msra.mxu0 0.0
    %1474 = vmatpush.msra.mxu0 0.0
    %1475 = vmatpush.msra.mxu0 0.0
    %1476 = vmatpush.msra.mxu0 0.0
    %1477 = vmatpush.msra.mxu0 0.0
    %1478 = vmatpush.msra.mxu0 0.0
    %1479 = vmatpush.msra.mxu0 0.0
    %1480 = vmatpush.msra.mxu0 0.0
    %1481 = vmatpush.msra.mxu0 0.0
    %v1482 = vand.u32 %v464, 4294901760
    %1483 = vmatpush.msra.mxu0 %v1482
    %v1484 = vand.u32 %v451, 4294901760
    %1485 = vmatpush.msra.mxu0 %v1484
    %v1486 = vand.u32 %v438, 4294901760
    %1487 = vmatpush.msra.mxu0 %v1486
    %v1488 = vand.u32 %v425, 4294901760
    %1489 = vmatpush.msra.mxu0 %v1488
    %v1490 = vand.u32 %v412, 4294901760
    %1491 = vmatpush.msra.mxu0 %v1490
    %v1492 = vand.u32 %v505, 4294901760
    %1493 = vmatmul.f32.gmra.mxu0 %v1492
    %v1494 = vpop.f32.mrf.mxu0
    %v1495 = vadd.f32 %v1469, %v1494
    %1496 = vdwg.mxu0
    %1497 = vmatpush.msra.mxu0 0.0
    %1498 = vmatpush.msra.mxu0 0.0
    %1499 = vmatpush.msra.mxu0 0.0
    %1500 = vmatpush.msra.mxu0 0.0
    %1501 = vmatpush.msra.mxu0 0.0
    %1502 = vmatpush.msra.mxu0 0.0
    %1503 = vmatpush.msra.mxu0 0.0
    %1504 = vmatpush.msra.mxu0 0.0
    %1505 = vmatpush.msra.mxu0 0.0
    %1506 = vmatpush.msra.mxu0 0.0
    %1507 = vmatpush.msra.mxu0 0.0
    %v1508 = vand.u32 %v465, 4294901760
    %1509 = vmatpush.msra.mxu0 %v1508
    %v1510 = vand.u32 %v452, 4294901760
    %1511 = vmatpush.msra.mxu0 %v1510
    %v1512 = vand.u32 %v439, 4294901760
    %1513 = vmatpush.msra.mxu0 %v1512
    %v1514 = vand.u32 %v426, 4294901760
    %1515 = vmatpush.msra.mxu0 %v1514
    %v1516 = vand.u32 %v413, 4294901760
    %1517 = vmatpush.msra.mxu0 %v1516
    %v1518 = vand.u32 %v505, 4294901760
    %v1519 = vsub.f32 %v505, %v1518
    %v1520 = vand.u32 %v1519, 4294901760
    %v1521 = vsub.f32 %v1519, %v1520
    %v1522 = vand.u32 %v1521, 4294901760
    %1523 = vmatmul.f32.gmra.mxu0 %v1522
    %v1524 = vpop.f32.mrf.mxu0
    %v1525 = vadd.f32 %v482, %v1524
    %1526 = vdwg.mxu0
    %1527 = vmatpush.msra.mxu0 0.0
    %1528 = vmatpush.msra.mxu0 0.0
    %1529 = vmatpush.msra.mxu0 0.0
    %1530 = vmatpush.msra.mxu0 0.0
    %1531 = vmatpush.msra.mxu0 0.0
    %1532 = vmatpush.msra.mxu0 0.0
    %1533 = vmatpush.msra.mxu0 0.0
    %1534 = vmatpush.msra.mxu0 0.0
    %1535 = vmatpush.msra.mxu0 0.0
    %1536 = vmatpush.msra.mxu0 0.0
    %1537 = vmatpush.msra.mxu0 0.0
    %v1538 = vand.u32 %v465, 4294901760
    %v1539 = vsub.f32 %v465, %v1538
    %v1540 = vand.u32 %v1539, 4294901760
    %v1541 = vsub.f32 %v1539, %v1540
    %v1542 = vand.u32 %v1541, 4294901760
    %1543 = vmatpush.msra.mxu0 %v1542
    %v1544 = vand.u32 %v452, 4294901760
    %v1545 = vsub.f32 %v452, %v1544
    %v1546 = vand.u32 %v1545, 4294901760
    %v1547 = vsub.f32 %v1545, %v1546
    %v1548 = vand.u32 %v1547, 4294901760
    %1549 = vmatpush.msra.mxu0 %v1548
    %v1550 = vand.u32 %v439, 4294901760
    %v1551 = vsub.f32 %v439, %v1550
    %v1552 = vand.u32 %v1551, 4294901760
    %v1553 = vsub.f32 %v1551, %v1552
    %v1554 = vand.u32 %v1553, 4294901760
    %1555 = vmatpush.msra.mxu0 %v1554
    %v1556 = vand.u32 %v426, 4294901760
    %v1557 = vsub.f32 %v426, %v1556
    %v1558 = vand.u32 %v1557, 4294901760
    %v1559 = vsub.f32 %v1557, %v1558
    %v1560 = vand.u32 %v1559, 4294901760
    %1561 = vmatpush.msra.mxu0 %v1560
    %v1562 = vand.u32 %v413, 4294901760
    %v1563 = vsub.f32 %v413, %v1562
    %v1564 = vand.u32 %v1563, 4294901760
    %v1565 = vsub.f32 %v1563, %v1564
    %v1566 = vand.u32 %v1565, 4294901760
    %1567 = vmatpush.msra.mxu0 %v1566
    %v1568 = vand.u32 %v505, 4294901760
    %1569 = vmatmul.f32.gmra.mxu0 %v1568
    %v1570 = vpop.f32.mrf.mxu0
    %v1571 = vadd.f32 %v1525, %v1570
    %1572 = vdwg.mxu0
    %1573 = vmatpush.msra.mxu0 0.0
    %1574 = vmatpush.msra.mxu0 0.0
    %1575 = vmatpush.msra.mxu0 0.0
    %1576 = vmatpush.msra.mxu0 0.0
    %1577 = vmatpush.msra.mxu0 0.0
    %1578 = vmatpush.msra.mxu0 0.0
    %1579 = vmatpush.msra.mxu0 0.0
    %1580 = vmatpush.msra.mxu0 0.0
    %1581 = vmatpush.msra.mxu0 0.0
    %1582 = vmatpush.msra.mxu0 0.0
    %1583 = vmatpush.msra.mxu0 0.0
    %v1584 = vand.u32 %v465, 4294901760
    %v1585 = vsub.f32 %v465, %v1584
    %1586 = vmatpush.msra.mxu0 %v1585
    %v1587 = vand.u32 %v452, 4294901760
    %v1588 = vsub.f32 %v452, %v1587
    %1589 = vmatpush.msra.mxu0 %v1588
    %v1590 = vand.u32 %v439, 4294901760
    %v1591 = vsub.f32 %v439, %v1590
    %1592 = vmatpush.msra.mxu0 %v1591
    %v1593 = vand.u32 %v426, 4294901760
    %v1594 = vsub.f32 %v426, %v1593
    %1595 = vmatpush.msra.mxu0 %v1594
    %v1596 = vand.u32 %v413, 4294901760
    %v1597 = vsub.f32 %v413, %v1596
    %1598 = vmatpush.msra.mxu0 %v1597
    %v1599 = vand.u32 %v505, 4294901760
    %v1600 = vsub.f32 %v505, %v1599
    %1601 = vmatmul.f32.gmra.mxu0 %v1600
    %v1602 = vpop.f32.mrf.mxu0
    %v1603 = vadd.f32 %v1571, %v1602
    %1604 = vdwg.mxu0
    %1605 = vmatpush.msra.mxu0 0.0
    %1606 = vmatpush.msra.mxu0 0.0
    %1607 = vmatpush.msra.mxu0 0.0
    %1608 = vmatpush.msra.mxu0 0.0
    %1609 = vmatpush.msra.mxu0 0.0
    %1610 = vmatpush.msra.mxu0 0.0
    %1611 = vmatpush.msra.mxu0 0.0
    %1612 = vmatpush.msra.mxu0 0.0
    %1613 = vmatpush.msra.mxu0 0.0
    %1614 = vmatpush.msra.mxu0 0.0
    %1615 = vmatpush.msra.mxu0 0.0
    %v1616 = vand.u32 %v465, 4294901760
    %1617 = vmatpush.msra.mxu0 %v1616
    %v1618 = vand.u32 %v452, 4294901760
    %1619 = vmatpush.msra.mxu0 %v1618
    %v1620 = vand.u32 %v439, 4294901760
    %1621 = vmatpush.msra.mxu0 %v1620
    %v1622 = vand.u32 %v426, 4294901760
    %1623 = vmatpush.msra.mxu0 %v1622
    %v1624 = vand.u32 %v413, 4294901760
    %1625 = vmatpush.msra.mxu0 %v1624
    %v1626 = vand.u32 %v505, 4294901760
    %v1627 = vsub.f32 %v505, %v1626
    %v1628 = vand.u32 %v1627, 4294901760
    %1629 = vmatmul.f32.gmra.mxu0 %v1628
    %v1630 = vpop.f32.mrf.mxu0
    %v1631 = vadd.f32 %v1603, %v1630
    %1632 = vdwg.mxu0
    %1633 = vmatpush.msra.mxu0 0.0
    %1634 = vmatpush.msra.mxu0 0.0
    %1635 = vmatpush.msra.mxu0 0.0
    %1636 = vmatpush.msra.mxu0 0.0
    %1637 = vmatpush.msra.mxu0 0.0
    %1638 = vmatpush.msra.mxu0 0.0
    %1639 = vmatpush.msra.mxu0 0.0
    %1640 = vmatpush.msra.mxu0 0.0
    %1641 = vmatpush.msra.mxu0 0.0
    %1642 = vmatpush.msra.mxu0 0.0
    %1643 = vmatpush.msra.mxu0 0.0
    %v1644 = vand.u32 %v465, 4294901760
    %v1645 = vsub.f32 %v465, %v1644
    %v1646 = vand.u32 %v1645, 4294901760
    %1647 = vmatpush.msra.mxu0 %v1646
    %v1648 = vand.u32 %v452, 4294901760
    %v1649 = vsub.f32 %v452, %v1648
    %v1650 = vand.u32 %v1649, 4294901760
    %1651 = vmatpush.msra.mxu0 %v1650
    %v1652 = vand.u32 %v439, 4294901760
    %v1653 = vsub.f32 %v439, %v1652
    %v1654 = vand.u32 %v1653, 4294901760
    %1655 = vmatpush.msra.mxu0 %v1654
    %v1656 = vand.u32 %v426, 4294901760
    %v1657 = vsub.f32 %v426, %v1656
    %v1658 = vand.u32 %v1657, 4294901760
    %1659 = vmatpush.msra.mxu0 %v1658
    %v1660 = vand.u32 %v413, 4294901760
    %v1661 = vsub.f32 %v413, %v1660
    %v1662 = vand.u32 %v1661, 4294901760
    %1663 = vmatpush.msra.mxu0 %v1662
    %v1664 = vand.u32 %v505, 4294901760
    %1665 = vmatmul.f32.gmra.mxu0 %v1664
    %v1666 = vpop.f32.mrf.mxu0
    %v1667 = vadd.f32 %v1631, %v1666
    %1668 = vdwg.mxu0
    %1669 = vmatpush.msra.mxu0 0.0
    %1670 = vmatpush.msra.mxu0 0.0
    %1671 = vmatpush.msra.mxu0 0.0
    %1672 = vmatpush.msra.mxu0 0.0
    %1673 = vmatpush.msra.mxu0 0.0
    %1674 = vmatpush.msra.mxu0 0.0
    %1675 = vmatpush.msra.mxu0 0.0
    %1676 = vmatpush.msra.mxu0 0.0
    %1677 = vmatpush.msra.mxu0 0.0
    %1678 = vmatpush.msra.mxu0 0.0
    %1679 = vmatpush.msra.mxu0 0.0
    %v1680 = vand.u32 %v465, 4294901760
    %1681 = vmatpush.msra.mxu0 %v1680
    %v1682 = vand.u32 %v452, 4294901760
    %1683 = vmatpush.msra.mxu0 %v1682
    %v1684 = vand.u32 %v439, 4294901760
    %1685 = vmatpush.msra.mxu0 %v1684
    %v1686 = vand.u32 %v426, 4294901760
    %1687 = vmatpush.msra.mxu0 %v1686
    %v1688 = vand.u32 %v413, 4294901760
    %1689 = vmatpush.msra.mxu0 %v1688
    %v1690 = vand.u32 %v505, 4294901760
    %1691 = vmatmul.f32.gmra.mxu0 %v1690
    %v1692 = vpop.f32.mrf.mxu0
    %v1693 = vadd.f32 %v1667, %v1692
    %1694 = vdwg.mxu0
    %1695 = vmatpush.msra.mxu0 0.0
    %1696 = vmatpush.msra.mxu0 0.0
    %1697 = vmatpush.msra.mxu0 0.0
    %1698 = vmatpush.msra.mxu0 0.0
    %1699 = vmatpush.msra.mxu0 0.0
    %1700 = vmatpush.msra.mxu0 0.0
    %1701 = vmatpush.msra.mxu0 0.0
    %1702 = vmatpush.msra.mxu0 0.0
    %1703 = vmatpush.msra.mxu0 0.0
    %1704 = vmatpush.msra.mxu0 0.0
    %1705 = vmatpush.msra.mxu0 0.0
    %v1706 = vand.u32 %v466, 4294901760
    %1707 = vmatpush.msra.mxu0 %v1706
    %v1708 = vand.u32 %v453, 4294901760
    %1709 = vmatpush.msra.mxu0 %v1708
    %v1710 = vand.u32 %v440, 4294901760
    %1711 = vmatpush.msra.mxu0 %v1710
    %v1712 = vand.u32 %v427, 4294901760
    %1713 = vmatpush.msra.mxu0 %v1712
    %v1714 = vand.u32 %v414, 4294901760
    %1715 = vmatpush.msra.mxu0 %v1714
    %v1716 = vand.u32 %v505, 4294901760
    %v1717 = vsub.f32 %v505, %v1716
    %v1718 = vand.u32 %v1717, 4294901760
    %v1719 = vsub.f32 %v1717, %v1718
    %v1720 = vand.u32 %v1719, 4294901760
    %1721 = vmatmul.f32.gmra.mxu0 %v1720
    %v1722 = vpop.f32.mrf.mxu0
    %v1723 = vadd.f32 %v483, %v1722
    %1724 = vdwg.mxu0
    %1725 = vmatpush.msra.mxu0 0.0
    %1726 = vmatpush.msra.mxu0 0.0
    %1727 = vmatpush.msra.mxu0 0.0
    %1728 = vmatpush.msra.mxu0 0.0
    %1729 = vmatpush.msra.mxu0 0.0
    %1730 = vmatpush.msra.mxu0 0.0
    %1731 = vmatpush.msra.mxu0 0.0
    %1732 = vmatpush.msra.mxu0 0.0
    %1733 = vmatpush.msra.mxu0 0.0
    %1734 = vmatpush.msra.mxu0 0.0
    %1735 = vmatpush.msra.mxu0 0.0
    %v1736 = vand.u32 %v466, 4294901760
    %v1737 = vsub.f32 %v466, %v1736
    %v1738 = vand.u32 %v1737, 4294901760
    %v1739 = vsub.f32 %v1737, %v1738
    %v1740 = vand.u32 %v1739, 4294901760
    %1741 = vmatpush.msra.mxu0 %v1740
    %v1742 = vand.u32 %v453, 4294901760
    %v1743 = vsub.f32 %v453, %v1742
    %v1744 = vand.u32 %v1743, 4294901760
    %v1745 = vsub.f32 %v1743, %v1744
    %v1746 = vand.u32 %v1745, 4294901760
    %1747 = vmatpush.msra.mxu0 %v1746
    %v1748 = vand.u32 %v440, 4294901760
    %v1749 = vsub.f32 %v440, %v1748
    %v1750 = vand.u32 %v1749, 4294901760
    %v1751 = vsub.f32 %v1749, %v1750
    %v1752 = vand.u32 %v1751, 4294901760
    %1753 = vmatpush.msra.mxu0 %v1752
    %v1754 = vand.u32 %v427, 4294901760
    %v1755 = vsub.f32 %v427, %v1754
    %v1756 = vand.u32 %v1755, 4294901760
    %v1757 = vsub.f32 %v1755, %v1756
    %v1758 = vand.u32 %v1757, 4294901760
    %1759 = vmatpush.msra.mxu0 %v1758
    %v1760 = vand.u32 %v414, 4294901760
    %v1761 = vsub.f32 %v414, %v1760
    %v1762 = vand.u32 %v1761, 4294901760
    %v1763 = vsub.f32 %v1761, %v1762
    %v1764 = vand.u32 %v1763, 4294901760
    %1765 = vmatpush.msra.mxu0 %v1764
    %v1766 = vand.u32 %v505, 4294901760
    %1767 = vmatmul.f32.gmra.mxu0 %v1766
    %v1768 = vpop.f32.mrf.mxu0
    %v1769 = vadd.f32 %v1723, %v1768
    %1770 = vdwg.mxu0
    %1771 = vmatpush.msra.mxu0 0.0
    %1772 = vmatpush.msra.mxu0 0.0
    %1773 = vmatpush.msra.mxu0 0.0
    %1774 = vmatpush.msra.mxu0 0.0
    %1775 = vmatpush.msra.mxu0 0.0
    %1776 = vmatpush.msra.mxu0 0.0
    %1777 = vmatpush.msra.mxu0 0.0
    %1778 = vmatpush.msra.mxu0 0.0
    %1779 = vmatpush.msra.mxu0 0.0
    %1780 = vmatpush.msra.mxu0 0.0
    %1781 = vmatpush.msra.mxu0 0.0
    %v1782 = vand.u32 %v466, 4294901760
    %v1783 = vsub.f32 %v466, %v1782
    %1784 = vmatpush.msra.mxu0 %v1783
    %v1785 = vand.u32 %v453, 4294901760
    %v1786 = vsub.f32 %v453, %v1785
    %1787 = vmatpush.msra.mxu0 %v1786
    %v1788 = vand.u32 %v440, 4294901760
    %v1789 = vsub.f32 %v440, %v1788
    %1790 = vmatpush.msra.mxu0 %v1789
    %v1791 = vand.u32 %v427, 4294901760
    %v1792 = vsub.f32 %v427, %v1791
    %1793 = vmatpush.msra.mxu0 %v1792
    %v1794 = vand.u32 %v414, 4294901760
    %v1795 = vsub.f32 %v414, %v1794
    %1796 = vmatpush.msra.mxu0 %v1795
    %v1797 = vand.u32 %v505, 4294901760
    %v1798 = vsub.f32 %v505, %v1797
    %1799 = vmatmul.f32.gmra.mxu0 %v1798
    %v1800 = vpop.f32.mrf.mxu0
    %v1801 = vadd.f32 %v1769, %v1800
    %1802 = vdwg.mxu0
    %1803 = vmatpush.msra.mxu0 0.0
    %1804 = vmatpush.msra.mxu0 0.0
    %1805 = vmatpush.msra.mxu0 0.0
    %1806 = vmatpush.msra.mxu0 0.0
    %1807 = vmatpush.msra.mxu0 0.0
    %1808 = vmatpush.msra.mxu0 0.0
    %1809 = vmatpush.msra.mxu0 0.0
    %1810 = vmatpush.msra.mxu0 0.0
    %1811 = vmatpush.msra.mxu0 0.0
    %1812 = vmatpush.msra.mxu0 0.0
    %1813 = vmatpush.msra.mxu0 0.0
    %v1814 = vand.u32 %v466, 4294901760
    %1815 = vmatpush.msra.mxu0 %v1814
    %v1816 = vand.u32 %v453, 4294901760
    %1817 = vmatpush.msra.mxu0 %v1816
    %v1818 = vand.u32 %v440, 4294901760
    %1819 = vmatpush.msra.mxu0 %v1818
    %v1820 = vand.u32 %v427, 4294901760
    %1821 = vmatpush.msra.mxu0 %v1820
    %v1822 = vand.u32 %v414, 4294901760
    %1823 = vmatpush.msra.mxu0 %v1822
    %v1824 = vand.u32 %v505, 4294901760
    %v1825 = vsub.f32 %v505, %v1824
    %v1826 = vand.u32 %v1825, 4294901760
    %1827 = vmatmul.f32.gmra.mxu0 %v1826
    %v1828 = vpop.f32.mrf.mxu0
    %v1829 = vadd.f32 %v1801, %v1828
    %1830 = vdwg.mxu0
    %1831 = vmatpush.msra.mxu0 0.0
    %1832 = vmatpush.msra.mxu0 0.0
    %1833 = vmatpush.msra.mxu0 0.0
    %1834 = vmatpush.msra.mxu0 0.0
    %1835 = vmatpush.msra.mxu0 0.0
    %1836 = vmatpush.msra.mxu0 0.0
    %1837 = vmatpush.msra.mxu0 0.0
    %1838 = vmatpush.msra.mxu0 0.0
    %1839 = vmatpush.msra.mxu0 0.0
    %1840 = vmatpush.msra.mxu0 0.0
    %1841 = vmatpush.msra.mxu0 0.0
    %v1842 = vand.u32 %v466, 4294901760
    %v1843 = vsub.f32 %v466, %v1842
    %v1844 = vand.u32 %v1843, 4294901760
    %1845 = vmatpush.msra.mxu0 %v1844
    %v1846 = vand.u32 %v453, 4294901760
    %v1847 = vsub.f32 %v453, %v1846
    %v1848 = vand.u32 %v1847, 4294901760
    %1849 = vmatpush.msra.mxu0 %v1848
    %v1850 = vand.u32 %v440, 4294901760
    %v1851 = vsub.f32 %v440, %v1850
    %v1852 = vand.u32 %v1851, 4294901760
    %1853 = vmatpush.msra.mxu0 %v1852
    %v1854 = vand.u32 %v427, 4294901760
    %v1855 = vsub.f32 %v427, %v1854
    %v1856 = vand.u32 %v1855, 4294901760
    %1857 = vmatpush.msra.mxu0 %v1856
    %v1858 = vand.u32 %v414, 4294901760
    %v1859 = vsub.f32 %v414, %v1858
    %v1860 = vand.u32 %v1859, 4294901760
    %1861 = vmatpush.msra.mxu0 %v1860
    %v1862 = vand.u32 %v505, 4294901760
    %1863 = vmatmul.f32.gmra.mxu0 %v1862
    %v1864 = vpop.f32.mrf.mxu0
    %v1865 = vadd.f32 %v1829, %v1864
    %1866 = vdwg.mxu0
    %1867 = vmatpush.msra.mxu0 0.0
    %1868 = vmatpush.msra.mxu0 0.0
    %1869 = vmatpush.msra.mxu0 0.0
    %1870 = vmatpush.msra.mxu0 0.0
    %1871 = vmatpush.msra.mxu0 0.0
    %1872 = vmatpush.msra.mxu0 0.0
    %1873 = vmatpush.msra.mxu0 0.0
    %1874 = vmatpush.msra.mxu0 0.0
    %1875 = vmatpush.msra.mxu0 0.0
    %1876 = vmatpush.msra.mxu0 0.0
    %1877 = vmatpush.msra.mxu0 0.0
    %v1878 = vand.u32 %v466, 4294901760
    %1879 = vmatpush.msra.mxu0 %v1878
    %v1880 = vand.u32 %v453, 4294901760
    %1881 = vmatpush.msra.mxu0 %v1880
    %v1882 = vand.u32 %v440, 4294901760
    %1883 = vmatpush.msra.mxu0 %v1882
    %v1884 = vand.u32 %v427, 4294901760
    %1885 = vmatpush.msra.mxu0 %v1884
    %v1886 = vand.u32 %v414, 4294901760
    %1887 = vmatpush.msra.mxu0 %v1886
    %v1888 = vand.u32 %v505, 4294901760
    %1889 = vmatmul.f32.gmra.mxu0 %v1888
    %v1890 = vpop.f32.mrf.mxu0
    %v1891 = vadd.f32 %v1865, %v1890
    %1892 = vdwg.mxu0
    %1893 = vmatpush.msra.mxu0 0.0
    %1894 = vmatpush.msra.mxu0 0.0
    %1895 = vmatpush.msra.mxu0 0.0
    %1896 = vmatpush.msra.mxu0 0.0
    %1897 = vmatpush.msra.mxu0 0.0
    %1898 = vmatpush.msra.mxu0 0.0
    %1899 = vmatpush.msra.mxu0 0.0
    %1900 = vmatpush.msra.mxu0 0.0
    %1901 = vmatpush.msra.mxu0 0.0
    %1902 = vmatpush.msra.mxu0 0.0
    %1903 = vmatpush.msra.mxu0 0.0
    %v1904 = vand.u32 %v467, 4294901760
    %1905 = vmatpush.msra.mxu0 %v1904
    %v1906 = vand.u32 %v454, 4294901760
    %1907 = vmatpush.msra.mxu0 %v1906
    %v1908 = vand.u32 %v441, 4294901760
    %1909 = vmatpush.msra.mxu0 %v1908
    %v1910 = vand.u32 %v428, 4294901760
    %1911 = vmatpush.msra.mxu0 %v1910
    %v1912 = vand.u32 %v415, 4294901760
    %1913 = vmatpush.msra.mxu0 %v1912
    %v1914 = vand.u32 %v505, 4294901760
    %v1915 = vsub.f32 %v505, %v1914
    %v1916 = vand.u32 %v1915, 4294901760
    %v1917 = vsub.f32 %v1915, %v1916
    %v1918 = vand.u32 %v1917, 4294901760
    %1919 = vmatmul.f32.gmra.mxu0 %v1918
    %v1920 = vpop.f32.mrf.mxu0
    %v1921 = vadd.f32 %v484, %v1920
    %1922 = vdwg.mxu0
    %1923 = vmatpush.msra.mxu0 0.0
    %1924 = vmatpush.msra.mxu0 0.0
    %1925 = vmatpush.msra.mxu0 0.0
    %1926 = vmatpush.msra.mxu0 0.0
    %1927 = vmatpush.msra.mxu0 0.0
    %1928 = vmatpush.msra.mxu0 0.0
    %1929 = vmatpush.msra.mxu0 0.0
    %1930 = vmatpush.msra.mxu0 0.0
    %1931 = vmatpush.msra.mxu0 0.0
    %1932 = vmatpush.msra.mxu0 0.0
    %1933 = vmatpush.msra.mxu0 0.0
    %v1934 = vand.u32 %v467, 4294901760
    %v1935 = vsub.f32 %v467, %v1934
    %v1936 = vand.u32 %v1935, 4294901760
    %v1937 = vsub.f32 %v1935, %v1936
    %v1938 = vand.u32 %v1937, 4294901760
    %1939 = vmatpush.msra.mxu0 %v1938
    %v1940 = vand.u32 %v454, 4294901760
    %v1941 = vsub.f32 %v454, %v1940
    %v1942 = vand.u32 %v1941, 4294901760
    %v1943 = vsub.f32 %v1941, %v1942
    %v1944 = vand.u32 %v1943, 4294901760
    %1945 = vmatpush.msra.mxu0 %v1944
    %v1946 = vand.u32 %v441, 4294901760
    %v1947 = vsub.f32 %v441, %v1946
    %v1948 = vand.u32 %v1947, 4294901760
    %v1949 = vsub.f32 %v1947, %v1948
    %v1950 = vand.u32 %v1949, 4294901760
    %1951 = vmatpush.msra.mxu0 %v1950
    %v1952 = vand.u32 %v428, 4294901760
    %v1953 = vsub.f32 %v428, %v1952
    %v1954 = vand.u32 %v1953, 4294901760
    %v1955 = vsub.f32 %v1953, %v1954
    %v1956 = vand.u32 %v1955, 4294901760
    %1957 = vmatpush.msra.mxu0 %v1956
    %v1958 = vand.u32 %v415, 4294901760
    %v1959 = vsub.f32 %v415, %v1958
    %v1960 = vand.u32 %v1959, 4294901760
    %v1961 = vsub.f32 %v1959, %v1960
    %v1962 = vand.u32 %v1961, 4294901760
    %1963 = vmatpush.msra.mxu0 %v1962
    %v1964 = vand.u32 %v505, 4294901760
    %1965 = vmatmul.f32.gmra.mxu0 %v1964
    %v1966 = vpop.f32.mrf.mxu0
    %v1967 = vadd.f32 %v1921, %v1966
    %1968 = vdwg.mxu0
    %1969 = vmatpush.msra.mxu0 0.0
    %1970 = vmatpush.msra.mxu0 0.0
    %1971 = vmatpush.msra.mxu0 0.0
    %1972 = vmatpush.msra.mxu0 0.0
    %1973 = vmatpush.msra.mxu0 0.0
    %1974 = vmatpush.msra.mxu0 0.0
    %1975 = vmatpush.msra.mxu0 0.0
    %1976 = vmatpush.msra.mxu0 0.0
    %1977 = vmatpush.msra.mxu0 0.0
    %1978 = vmatpush.msra.mxu0 0.0
    %1979 = vmatpush.msra.mxu0 0.0
    %v1980 = vand.u32 %v467, 4294901760
    %v1981 = vsub.f32 %v467, %v1980
    %1982 = vmatpush.msra.mxu0 %v1981
    %v1983 = vand.u32 %v454, 4294901760
    %v1984 = vsub.f32 %v454, %v1983
    %1985 = vmatpush.msra.mxu0 %v1984
    %v1986 = vand.u32 %v441, 4294901760
    %v1987 = vsub.f32 %v441, %v1986
    %1988 = vmatpush.msra.mxu0 %v1987
    %v1989 = vand.u32 %v428, 4294901760
    %v1990 = vsub.f32 %v428, %v1989
    %1991 = vmatpush.msra.mxu0 %v1990
    %v1992 = vand.u32 %v415, 4294901760
    %v1993 = vsub.f32 %v415, %v1992
    %1994 = vmatpush.msra.mxu0 %v1993
    %v1995 = vand.u32 %v505, 4294901760
    %v1996 = vsub.f32 %v505, %v1995
    %1997 = vmatmul.f32.gmra.mxu0 %v1996
    %v1998 = vpop.f32.mrf.mxu0
    %v1999 = vadd.f32 %v1967, %v1998
    %2000 = vdwg.mxu0
    %2001 = vmatpush.msra.mxu0 0.0
    %2002 = vmatpush.msra.mxu0 0.0
    %2003 = vmatpush.msra.mxu0 0.0
    %2004 = vmatpush.msra.mxu0 0.0
    %2005 = vmatpush.msra.mxu0 0.0
    %2006 = vmatpush.msra.mxu0 0.0
    %2007 = vmatpush.msra.mxu0 0.0
    %2008 = vmatpush.msra.mxu0 0.0
    %2009 = vmatpush.msra.mxu0 0.0
    %2010 = vmatpush.msra.mxu0 0.0
    %2011 = vmatpush.msra.mxu0 0.0
    %v2012 = vand.u32 %v467, 4294901760
    %2013 = vmatpush.msra.mxu0 %v2012
    %v2014 = vand.u32 %v454, 4294901760
    %2015 = vmatpush.msra.mxu0 %v2014
    %v2016 = vand.u32 %v441, 4294901760
    %2017 = vmatpush.msra.mxu0 %v2016
    %v2018 = vand.u32 %v428, 4294901760
    %2019 = vmatpush.msra.mxu0 %v2018
    %v2020 = vand.u32 %v415, 4294901760
    %2021 = vmatpush.msra.mxu0 %v2020
    %v2022 = vand.u32 %v505, 4294901760
    %v2023 = vsub.f32 %v505, %v2022
    %v2024 = vand.u32 %v2023, 4294901760
    %2025 = vmatmul.f32.gmra.mxu0 %v2024
    %v2026 = vpop.f32.mrf.mxu0
    %v2027 = vadd.f32 %v1999, %v2026
    %2028 = vdwg.mxu0
    %2029 = vmatpush.msra.mxu0 0.0
    %2030 = vmatpush.msra.mxu0 0.0
    %2031 = vmatpush.msra.mxu0 0.0
    %2032 = vmatpush.msra.mxu0 0.0
    %2033 = vmatpush.msra.mxu0 0.0
    %2034 = vmatpush.msra.mxu0 0.0
    %2035 = vmatpush.msra.mxu0 0.0
    %2036 = vmatpush.msra.mxu0 0.0
    %2037 = vmatpush.msra.mxu0 0.0
    %2038 = vmatpush.msra.mxu0 0.0
    %2039 = vmatpush.msra.mxu0 0.0
    %v2040 = vand.u32 %v467, 4294901760
    %v2041 = vsub.f32 %v467, %v2040
    %v2042 = vand.u32 %v2041, 4294901760
    %2043 = vmatpush.msra.mxu0 %v2042
    %v2044 = vand.u32 %v454, 4294901760
    %v2045 = vsub.f32 %v454, %v2044
    %v2046 = vand.u32 %v2045, 4294901760
    %2047 = vmatpush.msra.mxu0 %v2046
    %v2048 = vand.u32 %v441, 4294901760
    %v2049 = vsub.f32 %v441, %v2048
    %v2050 = vand.u32 %v2049, 4294901760
    %2051 = vmatpush.msra.mxu0 %v2050
    %v2052 = vand.u32 %v428, 4294901760
    %v2053 = vsub.f32 %v428, %v2052
    %v2054 = vand.u32 %v2053, 4294901760
    %2055 = vmatpush.msra.mxu0 %v2054
    %v2056 = vand.u32 %v415, 4294901760
    %v2057 = vsub.f32 %v415, %v2056
    %v2058 = vand.u32 %v2057, 4294901760
    %2059 = vmatpush.msra.mxu0 %v2058
    %v2060 = vand.u32 %v505, 4294901760
    %2061 = vmatmul.f32.gmra.mxu0 %v2060
    %v2062 = vpop.f32.mrf.mxu0
    %v2063 = vadd.f32 %v2027, %v2062
    %2064 = vdwg.mxu0
    %2065 = vmatpush.msra.mxu0 0.0
    %2066 = vmatpush.msra.mxu0 0.0
    %2067 = vmatpush.msra.mxu0 0.0
    %2068 = vmatpush.msra.mxu0 0.0
    %2069 = vmatpush.msra.mxu0 0.0
    %2070 = vmatpush.msra.mxu0 0.0
    %2071 = vmatpush.msra.mxu0 0.0
    %2072 = vmatpush.msra.mxu0 0.0
    %2073 = vmatpush.msra.mxu0 0.0
    %2074 = vmatpush.msra.mxu0 0.0
    %2075 = vmatpush.msra.mxu0 0.0
    %v2076 = vand.u32 %v467, 4294901760
    %2077 = vmatpush.msra.mxu0 %v2076
    %v2078 = vand.u32 %v454, 4294901760
    %2079 = vmatpush.msra.mxu0 %v2078
    %v2080 = vand.u32 %v441, 4294901760
    %2081 = vmatpush.msra.mxu0 %v2080
    %v2082 = vand.u32 %v428, 4294901760
    %2083 = vmatpush.msra.mxu0 %v2082
    %v2084 = vand.u32 %v415, 4294901760
    %2085 = vmatpush.msra.mxu0 %v2084
    %v2086 = vand.u32 %v505, 4294901760
    %2087 = vmatmul.f32.gmra.mxu0 %v2086
    %v2088 = vpop.f32.mrf.mxu0
    %v2089 = vadd.f32 %v2063, %v2088
    %2090 = vdwg.mxu0
    %2091 = vmatpush.msra.mxu0 0.0
    %2092 = vmatpush.msra.mxu0 0.0
    %2093 = vmatpush.msra.mxu0 0.0
    %2094 = vmatpush.msra.mxu0 0.0
    %2095 = vmatpush.msra.mxu0 0.0
    %2096 = vmatpush.msra.mxu0 0.0
    %2097 = vmatpush.msra.mxu0 0.0
    %2098 = vmatpush.msra.mxu0 0.0
    %2099 = vmatpush.msra.mxu0 0.0
    %2100 = vmatpush.msra.mxu0 0.0
    %2101 = vmatpush.msra.mxu0 0.0
    %v2102 = vand.u32 %v468, 4294901760
    %2103 = vmatpush.msra.mxu0 %v2102
    %v2104 = vand.u32 %v455, 4294901760
    %2105 = vmatpush.msra.mxu0 %v2104
    %v2106 = vand.u32 %v442, 4294901760
    %2107 = vmatpush.msra.mxu0 %v2106
    %v2108 = vand.u32 %v429, 4294901760
    %2109 = vmatpush.msra.mxu0 %v2108
    %v2110 = vand.u32 %v416, 4294901760
    %2111 = vmatpush.msra.mxu0 %v2110
    %v2112 = vand.u32 %v505, 4294901760
    %v2113 = vsub.f32 %v505, %v2112
    %v2114 = vand.u32 %v2113, 4294901760
    %v2115 = vsub.f32 %v2113, %v2114
    %v2116 = vand.u32 %v2115, 4294901760
    %2117 = vmatmul.f32.gmra.mxu0 %v2116
    %v2118 = vpop.f32.mrf.mxu0
    %v2119 = vadd.f32 %v485, %v2118
    %2120 = vdwg.mxu0
    %2121 = vmatpush.msra.mxu0 0.0
    %2122 = vmatpush.msra.mxu0 0.0
    %2123 = vmatpush.msra.mxu0 0.0
    %2124 = vmatpush.msra.mxu0 0.0
    %2125 = vmatpush.msra.mxu0 0.0
    %2126 = vmatpush.msra.mxu0 0.0
    %2127 = vmatpush.msra.mxu0 0.0
    %2128 = vmatpush.msra.mxu0 0.0
    %2129 = vmatpush.msra.mxu0 0.0
    %2130 = vmatpush.msra.mxu0 0.0
    %2131 = vmatpush.msra.mxu0 0.0
    %v2132 = vand.u32 %v468, 4294901760
    %v2133 = vsub.f32 %v468, %v2132
    %v2134 = vand.u32 %v2133, 4294901760
    %v2135 = vsub.f32 %v2133, %v2134
    %v2136 = vand.u32 %v2135, 4294901760
    %2137 = vmatpush.msra.mxu0 %v2136
    %v2138 = vand.u32 %v455, 4294901760
    %v2139 = vsub.f32 %v455, %v2138
    %v2140 = vand.u32 %v2139, 4294901760
    %v2141 = vsub.f32 %v2139, %v2140
    %v2142 = vand.u32 %v2141, 4294901760
    %2143 = vmatpush.msra.mxu0 %v2142
    %v2144 = vand.u32 %v442, 4294901760
    %v2145 = vsub.f32 %v442, %v2144
    %v2146 = vand.u32 %v2145, 4294901760
    %v2147 = vsub.f32 %v2145, %v2146
    %v2148 = vand.u32 %v2147, 4294901760
    %2149 = vmatpush.msra.mxu0 %v2148
    %v2150 = vand.u32 %v429, 4294901760
    %v2151 = vsub.f32 %v429, %v2150
    %v2152 = vand.u32 %v2151, 4294901760
    %v2153 = vsub.f32 %v2151, %v2152
    %v2154 = vand.u32 %v2153, 4294901760
    %2155 = vmatpush.msra.mxu0 %v2154
    %v2156 = vand.u32 %v416, 4294901760
    %v2157 = vsub.f32 %v416, %v2156
    %v2158 = vand.u32 %v2157, 4294901760
    %v2159 = vsub.f32 %v2157, %v2158
    %v2160 = vand.u32 %v2159, 4294901760
    %2161 = vmatpush.msra.mxu0 %v2160
    %v2162 = vand.u32 %v505, 4294901760
    %2163 = vmatmul.f32.gmra.mxu0 %v2162
    %v2164 = vpop.f32.mrf.mxu0
    %v2165 = vadd.f32 %v2119, %v2164
    %2166 = vdwg.mxu0
    %2167 = vmatpush.msra.mxu0 0.0
    %2168 = vmatpush.msra.mxu0 0.0
    %2169 = vmatpush.msra.mxu0 0.0
    %2170 = vmatpush.msra.mxu0 0.0
    %2171 = vmatpush.msra.mxu0 0.0
    %2172 = vmatpush.msra.mxu0 0.0
    %2173 = vmatpush.msra.mxu0 0.0
    %2174 = vmatpush.msra.mxu0 0.0
    %2175 = vmatpush.msra.mxu0 0.0
    %2176 = vmatpush.msra.mxu0 0.0
    %2177 = vmatpush.msra.mxu0 0.0
    %v2178 = vand.u32 %v468, 4294901760
    %v2179 = vsub.f32 %v468, %v2178
    %2180 = vmatpush.msra.mxu0 %v2179
    %v2181 = vand.u32 %v455, 4294901760
    %v2182 = vsub.f32 %v455, %v2181
    %2183 = vmatpush.msra.mxu0 %v2182
    %v2184 = vand.u32 %v442, 4294901760
    %v2185 = vsub.f32 %v442, %v2184
    %2186 = vmatpush.msra.mxu0 %v2185
    %v2187 = vand.u32 %v429, 4294901760
    %v2188 = vsub.f32 %v429, %v2187
    %2189 = vmatpush.msra.mxu0 %v2188
    %v2190 = vand.u32 %v416, 4294901760
    %v2191 = vsub.f32 %v416, %v2190
    %2192 = vmatpush.msra.mxu0 %v2191
    %v2193 = vand.u32 %v505, 4294901760
    %v2194 = vsub.f32 %v505, %v2193
    %2195 = vmatmul.f32.gmra.mxu0 %v2194
    %v2196 = vpop.f32.mrf.mxu0
    %v2197 = vadd.f32 %v2165, %v2196
    %2198 = vdwg.mxu0
    %2199 = vmatpush.msra.mxu0 0.0
    %2200 = vmatpush.msra.mxu0 0.0
    %2201 = vmatpush.msra.mxu0 0.0
    %2202 = vmatpush.msra.mxu0 0.0
    %2203 = vmatpush.msra.mxu0 0.0
    %2204 = vmatpush.msra.mxu0 0.0
    %2205 = vmatpush.msra.mxu0 0.0
    %2206 = vmatpush.msra.mxu0 0.0
    %2207 = vmatpush.msra.mxu0 0.0
    %2208 = vmatpush.msra.mxu0 0.0
    %2209 = vmatpush.msra.mxu0 0.0
    %v2210 = vand.u32 %v468, 4294901760
    %2211 = vmatpush.msra.mxu0 %v2210
    %v2212 = vand.u32 %v455, 4294901760
    %2213 = vmatpush.msra.mxu0 %v2212
    %v2214 = vand.u32 %v442, 4294901760
    %2215 = vmatpush.msra.mxu0 %v2214
    %v2216 = vand.u32 %v429, 4294901760
    %2217 = vmatpush.msra.mxu0 %v2216
    %v2218 = vand.u32 %v416, 4294901760
    %2219 = vmatpush.msra.mxu0 %v2218
    %v2220 = vand.u32 %v505, 4294901760
    %v2221 = vsub.f32 %v505, %v2220
    %v2222 = vand.u32 %v2221, 4294901760
    %2223 = vmatmul.f32.gmra.mxu0 %v2222
    %v2224 = vpop.f32.mrf.mxu0
    %v2225 = vadd.f32 %v2197, %v2224
    %2226 = vdwg.mxu0
    %2227 = vmatpush.msra.mxu0 0.0
    %2228 = vmatpush.msra.mxu0 0.0
    %2229 = vmatpush.msra.mxu0 0.0
    %2230 = vmatpush.msra.mxu0 0.0
    %2231 = vmatpush.msra.mxu0 0.0
    %2232 = vmatpush.msra.mxu0 0.0
    %2233 = vmatpush.msra.mxu0 0.0
    %2234 = vmatpush.msra.mxu0 0.0
    %2235 = vmatpush.msra.mxu0 0.0
    %2236 = vmatpush.msra.mxu0 0.0
    %2237 = vmatpush.msra.mxu0 0.0
    %v2238 = vand.u32 %v468, 4294901760
    %v2239 = vsub.f32 %v468, %v2238
    %v2240 = vand.u32 %v2239, 4294901760
    %2241 = vmatpush.msra.mxu0 %v2240
    %v2242 = vand.u32 %v455, 4294901760
    %v2243 = vsub.f32 %v455, %v2242
    %v2244 = vand.u32 %v2243, 4294901760
    %2245 = vmatpush.msra.mxu0 %v2244
    %v2246 = vand.u32 %v442, 4294901760
    %v2247 = vsub.f32 %v442, %v2246
    %v2248 = vand.u32 %v2247, 4294901760
    %2249 = vmatpush.msra.mxu0 %v2248
    %v2250 = vand.u32 %v429, 4294901760
    %v2251 = vsub.f32 %v429, %v2250
    %v2252 = vand.u32 %v2251, 4294901760
    %2253 = vmatpush.msra.mxu0 %v2252
    %v2254 = vand.u32 %v416, 4294901760
    %v2255 = vsub.f32 %v416, %v2254
    %v2256 = vand.u32 %v2255, 4294901760
    %2257 = vmatpush.msra.mxu0 %v2256
    %v2258 = vand.u32 %v505, 4294901760
    %2259 = vmatmul.f32.gmra.mxu0 %v2258
    %v2260 = vpop.f32.mrf.mxu0
    %v2261 = vadd.f32 %v2225, %v2260
    %2262 = vdwg.mxu0
    %2263 = vmatpush.msra.mxu0 0.0
    %2264 = vmatpush.msra.mxu0 0.0
    %2265 = vmatpush.msra.mxu0 0.0
    %2266 = vmatpush.msra.mxu0 0.0
    %2267 = vmatpush.msra.mxu0 0.0
    %2268 = vmatpush.msra.mxu0 0.0
    %2269 = vmatpush.msra.mxu0 0.0
    %2270 = vmatpush.msra.mxu0 0.0
    %2271 = vmatpush.msra.mxu0 0.0
    %2272 = vmatpush.msra.mxu0 0.0
    %2273 = vmatpush.msra.mxu0 0.0
    %v2274 = vand.u32 %v468, 4294901760
    %2275 = vmatpush.msra.mxu0 %v2274
    %v2276 = vand.u32 %v455, 4294901760
    %2277 = vmatpush.msra.mxu0 %v2276
    %v2278 = vand.u32 %v442, 4294901760
    %2279 = vmatpush.msra.mxu0 %v2278
    %v2280 = vand.u32 %v429, 4294901760
    %2281 = vmatpush.msra.mxu0 %v2280
    %v2282 = vand.u32 %v416, 4294901760
    %2283 = vmatpush.msra.mxu0 %v2282
    %v2284 = vand.u32 %v505, 4294901760
    %2285 = vmatmul.f32.gmra.mxu0 %v2284
    %v2286 = vpop.f32.mrf.mxu0
    %v2287 = vadd.f32 %v2261, %v2286
    %2288 = vdwg.mxu0
    %2289 = vmatpush.msra.mxu0 0.0
    %2290 = vmatpush.msra.mxu0 0.0
    %2291 = vmatpush.msra.mxu0 0.0
    %2292 = vmatpush.msra.mxu0 0.0
    %2293 = vmatpush.msra.mxu0 0.0
    %2294 = vmatpush.msra.mxu0 0.0
    %2295 = vmatpush.msra.mxu0 0.0
    %2296 = vmatpush.msra.mxu0 0.0
    %2297 = vmatpush.msra.mxu0 0.0
    %2298 = vmatpush.msra.mxu0 0.0
    %2299 = vmatpush.msra.mxu0 0.0
    %v2300 = vand.u32 %v469, 4294901760
    %2301 = vmatpush.msra.mxu0 %v2300
    %v2302 = vand.u32 %v456, 4294901760
    %2303 = vmatpush.msra.mxu0 %v2302
    %v2304 = vand.u32 %v443, 4294901760
    %2305 = vmatpush.msra.mxu0 %v2304
    %v2306 = vand.u32 %v430, 4294901760
    %2307 = vmatpush.msra.mxu0 %v2306
    %v2308 = vand.u32 %v417, 4294901760
    %2309 = vmatpush.msra.mxu0 %v2308
    %v2310 = vand.u32 %v505, 4294901760
    %v2311 = vsub.f32 %v505, %v2310
    %v2312 = vand.u32 %v2311, 4294901760
    %v2313 = vsub.f32 %v2311, %v2312
    %v2314 = vand.u32 %v2313, 4294901760
    %2315 = vmatmul.f32.gmra.mxu0 %v2314
    %v2316 = vpop.f32.mrf.mxu0
    %v2317 = vadd.f32 %v486, %v2316
    %2318 = vdwg.mxu0
    %2319 = vmatpush.msra.mxu0 0.0
    %2320 = vmatpush.msra.mxu0 0.0
    %2321 = vmatpush.msra.mxu0 0.0
    %2322 = vmatpush.msra.mxu0 0.0
    %2323 = vmatpush.msra.mxu0 0.0
    %2324 = vmatpush.msra.mxu0 0.0
    %2325 = vmatpush.msra.mxu0 0.0
    %2326 = vmatpush.msra.mxu0 0.0
    %2327 = vmatpush.msra.mxu0 0.0
    %2328 = vmatpush.msra.mxu0 0.0
    %2329 = vmatpush.msra.mxu0 0.0
    %v2330 = vand.u32 %v469, 4294901760
    %v2331 = vsub.f32 %v469, %v2330
    %v2332 = vand.u32 %v2331, 4294901760
    %v2333 = vsub.f32 %v2331, %v2332
    %v2334 = vand.u32 %v2333, 4294901760
    %2335 = vmatpush.msra.mxu0 %v2334
    %v2336 = vand.u32 %v456, 4294901760
    %v2337 = vsub.f32 %v456, %v2336
    %v2338 = vand.u32 %v2337, 4294901760
    %v2339 = vsub.f32 %v2337, %v2338
    %v2340 = vand.u32 %v2339, 4294901760
    %2341 = vmatpush.msra.mxu0 %v2340
    %v2342 = vand.u32 %v443, 4294901760
    %v2343 = vsub.f32 %v443, %v2342
    %v2344 = vand.u32 %v2343, 4294901760
    %v2345 = vsub.f32 %v2343, %v2344
    %v2346 = vand.u32 %v2345, 4294901760
    %2347 = vmatpush.msra.mxu0 %v2346
    %v2348 = vand.u32 %v430, 4294901760
    %v2349 = vsub.f32 %v430, %v2348
    %v2350 = vand.u32 %v2349, 4294901760
    %v2351 = vsub.f32 %v2349, %v2350
    %v2352 = vand.u32 %v2351, 4294901760
    %2353 = vmatpush.msra.mxu0 %v2352
    %v2354 = vand.u32 %v417, 4294901760
    %v2355 = vsub.f32 %v417, %v2354
    %v2356 = vand.u32 %v2355, 4294901760
    %v2357 = vsub.f32 %v2355, %v2356
    %v2358 = vand.u32 %v2357, 4294901760
    %2359 = vmatpush.msra.mxu0 %v2358
    %v2360 = vand.u32 %v505, 4294901760
    %2361 = vmatmul.f32.gmra.mxu0 %v2360
    %v2362 = vpop.f32.mrf.mxu0
    %v2363 = vadd.f32 %v2317, %v2362
    %2364 = vdwg.mxu0
    %2365 = vmatpush.msra.mxu0 0.0
    %2366 = vmatpush.msra.mxu0 0.0
    %2367 = vmatpush.msra.mxu0 0.0
    %2368 = vmatpush.msra.mxu0 0.0
    %2369 = vmatpush.msra.mxu0 0.0
    %2370 = vmatpush.msra.mxu0 0.0
    %2371 = vmatpush.msra.mxu0 0.0
    %2372 = vmatpush.msra.mxu0 0.0
    %2373 = vmatpush.msra.mxu0 0.0
    %2374 = vmatpush.msra.mxu0 0.0
    %2375 = vmatpush.msra.mxu0 0.0
    %v2376 = vand.u32 %v469, 4294901760
    %v2377 = vsub.f32 %v469, %v2376
    %2378 = vmatpush.msra.mxu0 %v2377
    %v2379 = vand.u32 %v456, 4294901760
    %v2380 = vsub.f32 %v456, %v2379
    %2381 = vmatpush.msra.mxu0 %v2380
    %v2382 = vand.u32 %v443, 4294901760
    %v2383 = vsub.f32 %v443, %v2382
    %2384 = vmatpush.msra.mxu0 %v2383
    %v2385 = vand.u32 %v430, 4294901760
    %v2386 = vsub.f32 %v430, %v2385
    %2387 = vmatpush.msra.mxu0 %v2386
    %v2388 = vand.u32 %v417, 4294901760
    %v2389 = vsub.f32 %v417, %v2388
    %2390 = vmatpush.msra.mxu0 %v2389
    %v2391 = vand.u32 %v505, 4294901760
    %v2392 = vsub.f32 %v505, %v2391
    %2393 = vmatmul.f32.gmra.mxu0 %v2392
    %v2394 = vpop.f32.mrf.mxu0
    %v2395 = vadd.f32 %v2363, %v2394
    %2396 = vdwg.mxu0
    %2397 = vmatpush.msra.mxu0 0.0
    %2398 = vmatpush.msra.mxu0 0.0
    %2399 = vmatpush.msra.mxu0 0.0
    %2400 = vmatpush.msra.mxu0 0.0
    %2401 = vmatpush.msra.mxu0 0.0
    %2402 = vmatpush.msra.mxu0 0.0
    %2403 = vmatpush.msra.mxu0 0.0
    %2404 = vmatpush.msra.mxu0 0.0
    %2405 = vmatpush.msra.mxu0 0.0
    %2406 = vmatpush.msra.mxu0 0.0
    %2407 = vmatpush.msra.mxu0 0.0
    %v2408 = vand.u32 %v469, 4294901760
    %2409 = vmatpush.msra.mxu0 %v2408
    %v2410 = vand.u32 %v456, 4294901760
    %2411 = vmatpush.msra.mxu0 %v2410
    %v2412 = vand.u32 %v443, 4294901760
    %2413 = vmatpush.msra.mxu0 %v2412
    %v2414 = vand.u32 %v430, 4294901760
    %2415 = vmatpush.msra.mxu0 %v2414
    %v2416 = vand.u32 %v417, 4294901760
    %2417 = vmatpush.msra.mxu0 %v2416
    %v2418 = vand.u32 %v505, 4294901760
    %v2419 = vsub.f32 %v505, %v2418
    %v2420 = vand.u32 %v2419, 4294901760
    %2421 = vmatmul.f32.gmra.mxu0 %v2420
    %v2422 = vpop.f32.mrf.mxu0
    %v2423 = vadd.f32 %v2395, %v2422
    %2424 = vdwg.mxu0
    %2425 = vmatpush.msra.mxu0 0.0
    %2426 = vmatpush.msra.mxu0 0.0
    %2427 = vmatpush.msra.mxu0 0.0
    %2428 = vmatpush.msra.mxu0 0.0
    %2429 = vmatpush.msra.mxu0 0.0
    %2430 = vmatpush.msra.mxu0 0.0
    %2431 = vmatpush.msra.mxu0 0.0
    %2432 = vmatpush.msra.mxu0 0.0
    %2433 = vmatpush.msra.mxu0 0.0
    %2434 = vmatpush.msra.mxu0 0.0
    %2435 = vmatpush.msra.mxu0 0.0
    %v2436 = vand.u32 %v469, 4294901760
    %v2437 = vsub.f32 %v469, %v2436
    %v2438 = vand.u32 %v2437, 4294901760
    %2439 = vmatpush.msra.mxu0 %v2438
    %v2440 = vand.u32 %v456, 4294901760
    %v2441 = vsub.f32 %v456, %v2440
    %v2442 = vand.u32 %v2441, 4294901760
    %2443 = vmatpush.msra.mxu0 %v2442
    %v2444 = vand.u32 %v443, 4294901760
    %v2445 = vsub.f32 %v443, %v2444
    %v2446 = vand.u32 %v2445, 4294901760
    %2447 = vmatpush.msra.mxu0 %v2446
    %v2448 = vand.u32 %v430, 4294901760
    %v2449 = vsub.f32 %v430, %v2448
    %v2450 = vand.u32 %v2449, 4294901760
    %2451 = vmatpush.msra.mxu0 %v2450
    %v2452 = vand.u32 %v417, 4294901760
    %v2453 = vsub.f32 %v417, %v2452
    %v2454 = vand.u32 %v2453, 4294901760
    %2455 = vmatpush.msra.mxu0 %v2454
    %v2456 = vand.u32 %v505, 4294901760
    %2457 = vmatmul.f32.gmra.mxu0 %v2456
    %v2458 = vpop.f32.mrf.mxu0
    %v2459 = vadd.f32 %v2423, %v2458
    %2460 = vdwg.mxu0
    %2461 = vmatpush.msra.mxu0 0.0
    %2462 = vmatpush.msra.mxu0 0.0
    %2463 = vmatpush.msra.mxu0 0.0
    %2464 = vmatpush.msra.mxu0 0.0
    %2465 = vmatpush.msra.mxu0 0.0
    %2466 = vmatpush.msra.mxu0 0.0
    %2467 = vmatpush.msra.mxu0 0.0
    %2468 = vmatpush.msra.mxu0 0.0
    %2469 = vmatpush.msra.mxu0 0.0
    %2470 = vmatpush.msra.mxu0 0.0
    %2471 = vmatpush.msra.mxu0 0.0
    %v2472 = vand.u32 %v469, 4294901760
    %2473 = vmatpush.msra.mxu0 %v2472
    %v2474 = vand.u32 %v456, 4294901760
    %2475 = vmatpush.msra.mxu0 %v2474
    %v2476 = vand.u32 %v443, 4294901760
    %2477 = vmatpush.msra.mxu0 %v2476
    %v2478 = vand.u32 %v430, 4294901760
    %2479 = vmatpush.msra.mxu0 %v2478
    %v2480 = vand.u32 %v417, 4294901760
    %2481 = vmatpush.msra.mxu0 %v2480
    %v2482 = vand.u32 %v505, 4294901760
    %2483 = vmatmul.f32.gmra.mxu0 %v2482
    %v2484 = vpop.f32.mrf.mxu0
    %v2485 = vadd.f32 %v2459, %v2484
    %2486 = vdwg.mxu0
    %2487 = vmatpush.msra.mxu0 0.0
    %2488 = vmatpush.msra.mxu0 0.0
    %2489 = vmatpush.msra.mxu0 0.0
    %2490 = vmatpush.msra.mxu0 0.0
    %2491 = vmatpush.msra.mxu0 0.0
    %2492 = vmatpush.msra.mxu0 0.0
    %2493 = vmatpush.msra.mxu0 0.0
    %2494 = vmatpush.msra.mxu0 0.0
    %2495 = vmatpush.msra.mxu0 0.0
    %2496 = vmatpush.msra.mxu0 0.0
    %2497 = vmatpush.msra.mxu0 0.0
    %v2498 = vand.u32 %v470, 4294901760
    %2499 = vmatpush.msra.mxu0 %v2498
    %v2500 = vand.u32 %v457, 4294901760
    %2501 = vmatpush.msra.mxu0 %v2500
    %v2502 = vand.u32 %v444, 4294901760
    %2503 = vmatpush.msra.mxu0 %v2502
    %v2504 = vand.u32 %v431, 4294901760
    %2505 = vmatpush.msra.mxu0 %v2504
    %v2506 = vand.u32 %v418, 4294901760
    %2507 = vmatpush.msra.mxu0 %v2506
    %v2508 = vand.u32 %v505, 4294901760
    %v2509 = vsub.f32 %v505, %v2508
    %v2510 = vand.u32 %v2509, 4294901760
    %v2511 = vsub.f32 %v2509, %v2510
    %v2512 = vand.u32 %v2511, 4294901760
    %2513 = vmatmul.f32.gmra.mxu0 %v2512
    %v2514 = vpop.f32.mrf.mxu0
    %v2515 = vadd.f32 %v487, %v2514
    %2516 = vdwg.mxu0
    %2517 = vmatpush.msra.mxu0 0.0
    %2518 = vmatpush.msra.mxu0 0.0
    %2519 = vmatpush.msra.mxu0 0.0
    %2520 = vmatpush.msra.mxu0 0.0
    %2521 = vmatpush.msra.mxu0 0.0
    %2522 = vmatpush.msra.mxu0 0.0
    %2523 = vmatpush.msra.mxu0 0.0
    %2524 = vmatpush.msra.mxu0 0.0
    %2525 = vmatpush.msra.mxu0 0.0
    %2526 = vmatpush.msra.mxu0 0.0
    %2527 = vmatpush.msra.mxu0 0.0
    %v2528 = vand.u32 %v470, 4294901760
    %v2529 = vsub.f32 %v470, %v2528
    %v2530 = vand.u32 %v2529, 4294901760
    %v2531 = vsub.f32 %v2529, %v2530
    %v2532 = vand.u32 %v2531, 4294901760
    %2533 = vmatpush.msra.mxu0 %v2532
    %v2534 = vand.u32 %v457, 4294901760
    %v2535 = vsub.f32 %v457, %v2534
    %v2536 = vand.u32 %v2535, 4294901760
    %v2537 = vsub.f32 %v2535, %v2536
    %v2538 = vand.u32 %v2537, 4294901760
    %2539 = vmatpush.msra.mxu0 %v2538
    %v2540 = vand.u32 %v444, 4294901760
    %v2541 = vsub.f32 %v444, %v2540
    %v2542 = vand.u32 %v2541, 4294901760
    %v2543 = vsub.f32 %v2541, %v2542
    %v2544 = vand.u32 %v2543, 4294901760
    %2545 = vmatpush.msra.mxu0 %v2544
    %v2546 = vand.u32 %v431, 4294901760
    %v2547 = vsub.f32 %v431, %v2546
    %v2548 = vand.u32 %v2547, 4294901760
    %v2549 = vsub.f32 %v2547, %v2548
    %v2550 = vand.u32 %v2549, 4294901760
    %2551 = vmatpush.msra.mxu0 %v2550
    %v2552 = vand.u32 %v418, 4294901760
    %v2553 = vsub.f32 %v418, %v2552
    %v2554 = vand.u32 %v2553, 4294901760
    %v2555 = vsub.f32 %v2553, %v2554
    %v2556 = vand.u32 %v2555, 4294901760
    %2557 = vmatpush.msra.mxu0 %v2556
    %v2558 = vand.u32 %v505, 4294901760
    %2559 = vmatmul.f32.gmra.mxu0 %v2558
    %v2560 = vpop.f32.mrf.mxu0
    %v2561 = vadd.f32 %v2515, %v2560
    %2562 = vdwg.mxu0
    %2563 = vmatpush.msra.mxu0 0.0
    %2564 = vmatpush.msra.mxu0 0.0
    %2565 = vmatpush.msra.mxu0 0.0
    %2566 = vmatpush.msra.mxu0 0.0
    %2567 = vmatpush.msra.mxu0 0.0
    %2568 = vmatpush.msra.mxu0 0.0
    %2569 = vmatpush.msra.mxu0 0.0
    %2570 = vmatpush.msra.mxu0 0.0
    %2571 = vmatpush.msra.mxu0 0.0
    %2572 = vmatpush.msra.mxu0 0.0
    %2573 = vmatpush.msra.mxu0 0.0
    %v2574 = vand.u32 %v470, 4294901760
    %v2575 = vsub.f32 %v470, %v2574
    %2576 = vmatpush.msra.mxu0 %v2575
    %v2577 = vand.u32 %v457, 4294901760
    %v2578 = vsub.f32 %v457, %v2577
    %2579 = vmatpush.msra.mxu0 %v2578
    %v2580 = vand.u32 %v444, 4294901760
    %v2581 = vsub.f32 %v444, %v2580
    %2582 = vmatpush.msra.mxu0 %v2581
    %v2583 = vand.u32 %v431, 4294901760
    %v2584 = vsub.f32 %v431, %v2583
    %2585 = vmatpush.msra.mxu0 %v2584
    %v2586 = vand.u32 %v418, 4294901760
    %v2587 = vsub.f32 %v418, %v2586
    %2588 = vmatpush.msra.mxu0 %v2587
    %v2589 = vand.u32 %v505, 4294901760
    %v2590 = vsub.f32 %v505, %v2589
    %2591 = vmatmul.f32.gmra.mxu0 %v2590
    %v2592 = vpop.f32.mrf.mxu0
    %v2593 = vadd.f32 %v2561, %v2592
    %2594 = vdwg.mxu0
    %2595 = vmatpush.msra.mxu0 0.0
    %2596 = vmatpush.msra.mxu0 0.0
    %2597 = vmatpush.msra.mxu0 0.0
    %2598 = vmatpush.msra.mxu0 0.0
    %2599 = vmatpush.msra.mxu0 0.0
    %2600 = vmatpush.msra.mxu0 0.0
    %2601 = vmatpush.msra.mxu0 0.0
    %2602 = vmatpush.msra.mxu0 0.0
    %2603 = vmatpush.msra.mxu0 0.0
    %2604 = vmatpush.msra.mxu0 0.0
    %2605 = vmatpush.msra.mxu0 0.0
    %v2606 = vand.u32 %v470, 4294901760
    %2607 = vmatpush.msra.mxu0 %v2606
    %v2608 = vand.u32 %v457, 4294901760
    %2609 = vmatpush.msra.mxu0 %v2608
    %v2610 = vand.u32 %v444, 4294901760
    %2611 = vmatpush.msra.mxu0 %v2610
    %v2612 = vand.u32 %v431, 4294901760
    %2613 = vmatpush.msra.mxu0 %v2612
    %v2614 = vand.u32 %v418, 4294901760
    %2615 = vmatpush.msra.mxu0 %v2614
    %v2616 = vand.u32 %v505, 4294901760
    %v2617 = vsub.f32 %v505, %v2616
    %v2618 = vand.u32 %v2617, 4294901760
    %2619 = vmatmul.f32.gmra.mxu0 %v2618
    %v2620 = vpop.f32.mrf.mxu0
    %v2621 = vadd.f32 %v2593, %v2620
    %2622 = vdwg.mxu0
    %2623 = vmatpush.msra.mxu0 0.0
    %2624 = vmatpush.msra.mxu0 0.0
    %2625 = vmatpush.msra.mxu0 0.0
    %2626 = vmatpush.msra.mxu0 0.0
    %2627 = vmatpush.msra.mxu0 0.0
    %2628 = vmatpush.msra.mxu0 0.0
    %2629 = vmatpush.msra.mxu0 0.0
    %2630 = vmatpush.msra.mxu0 0.0
    %2631 = vmatpush.msra.mxu0 0.0
    %2632 = vmatpush.msra.mxu0 0.0
    %2633 = vmatpush.msra.mxu0 0.0
    %v2634 = vand.u32 %v470, 4294901760
    %v2635 = vsub.f32 %v470, %v2634
    %v2636 = vand.u32 %v2635, 4294901760
    %2637 = vmatpush.msra.mxu0 %v2636
    %v2638 = vand.u32 %v457, 4294901760
    %v2639 = vsub.f32 %v457, %v2638
    %v2640 = vand.u32 %v2639, 4294901760
    %2641 = vmatpush.msra.mxu0 %v2640
    %v2642 = vand.u32 %v444, 4294901760
    %v2643 = vsub.f32 %v444, %v2642
    %v2644 = vand.u32 %v2643, 4294901760
    %2645 = vmatpush.msra.mxu0 %v2644
    %v2646 = vand.u32 %v431, 4294901760
    %v2647 = vsub.f32 %v431, %v2646
    %v2648 = vand.u32 %v2647, 4294901760
    %2649 = vmatpush.msra.mxu0 %v2648
    %v2650 = vand.u32 %v418, 4294901760
    %v2651 = vsub.f32 %v418, %v2650
    %v2652 = vand.u32 %v2651, 4294901760
    %2653 = vmatpush.msra.mxu0 %v2652
    %v2654 = vand.u32 %v505, 4294901760
    %2655 = vmatmul.f32.gmra.mxu0 %v2654
    %v2656 = vpop.f32.mrf.mxu0
    %v2657 = vadd.f32 %v2621, %v2656
    %2658 = vdwg.mxu0
    %2659 = vmatpush.msra.mxu0 0.0
    %2660 = vmatpush.msra.mxu0 0.0
    %2661 = vmatpush.msra.mxu0 0.0
    %2662 = vmatpush.msra.mxu0 0.0
    %2663 = vmatpush.msra.mxu0 0.0
    %2664 = vmatpush.msra.mxu0 0.0
    %2665 = vmatpush.msra.mxu0 0.0
    %2666 = vmatpush.msra.mxu0 0.0
    %2667 = vmatpush.msra.mxu0 0.0
    %2668 = vmatpush.msra.mxu0 0.0
    %2669 = vmatpush.msra.mxu0 0.0
    %v2670 = vand.u32 %v470, 4294901760
    %2671 = vmatpush.msra.mxu0 %v2670
    %v2672 = vand.u32 %v457, 4294901760
    %2673 = vmatpush.msra.mxu0 %v2672
    %v2674 = vand.u32 %v444, 4294901760
    %2675 = vmatpush.msra.mxu0 %v2674
    %v2676 = vand.u32 %v431, 4294901760
    %2677 = vmatpush.msra.mxu0 %v2676
    %v2678 = vand.u32 %v418, 4294901760
    %2679 = vmatpush.msra.mxu0 %v2678
    %v2680 = vand.u32 %v505, 4294901760
    %2681 = vmatmul.f32.gmra.mxu0 %v2680
    %v2682 = vpop.f32.mrf.mxu0
    %v2683 = vadd.f32 %v2657, %v2682
    %2684 = vdwg.mxu0
    %2685 = vmatpush.msra.mxu0 0.0
    %2686 = vmatpush.msra.mxu0 0.0
    %2687 = vmatpush.msra.mxu0 0.0
    %2688 = vmatpush.msra.mxu0 0.0
    %2689 = vmatpush.msra.mxu0 0.0
    %2690 = vmatpush.msra.mxu0 0.0
    %2691 = vmatpush.msra.mxu0 0.0
    %2692 = vmatpush.msra.mxu0 0.0
    %2693 = vmatpush.msra.mxu0 0.0
    %2694 = vmatpush.msra.mxu0 0.0
    %2695 = vmatpush.msra.mxu0 0.0
    %v2696 = vand.u32 %v471, 4294901760
    %2697 = vmatpush.msra.mxu0 %v2696
    %v2698 = vand.u32 %v458, 4294901760
    %2699 = vmatpush.msra.mxu0 %v2698
    %v2700 = vand.u32 %v445, 4294901760
    %2701 = vmatpush.msra.mxu0 %v2700
    %v2702 = vand.u32 %v432, 4294901760
    %2703 = vmatpush.msra.mxu0 %v2702
    %v2704 = vand.u32 %v419, 4294901760
    %2705 = vmatpush.msra.mxu0 %v2704
    %v2706 = vand.u32 %v505, 4294901760
    %v2707 = vsub.f32 %v505, %v2706
    %v2708 = vand.u32 %v2707, 4294901760
    %v2709 = vsub.f32 %v2707, %v2708
    %v2710 = vand.u32 %v2709, 4294901760
    %2711 = vmatmul.f32.gmra.mxu0 %v2710
    %v2712 = vpop.f32.mrf.mxu0
    %v2713 = vadd.f32 %v488, %v2712
    %2714 = vdwg.mxu0
    %2715 = vmatpush.msra.mxu0 0.0
    %2716 = vmatpush.msra.mxu0 0.0
    %2717 = vmatpush.msra.mxu0 0.0
    %2718 = vmatpush.msra.mxu0 0.0
    %2719 = vmatpush.msra.mxu0 0.0
    %2720 = vmatpush.msra.mxu0 0.0
    %2721 = vmatpush.msra.mxu0 0.0
    %2722 = vmatpush.msra.mxu0 0.0
    %2723 = vmatpush.msra.mxu0 0.0
    %2724 = vmatpush.msra.mxu0 0.0
    %2725 = vmatpush.msra.mxu0 0.0
    %v2726 = vand.u32 %v471, 4294901760
    %v2727 = vsub.f32 %v471, %v2726
    %v2728 = vand.u32 %v2727, 4294901760
    %v2729 = vsub.f32 %v2727, %v2728
    %v2730 = vand.u32 %v2729, 4294901760
    %2731 = vmatpush.msra.mxu0 %v2730
    %v2732 = vand.u32 %v458, 4294901760
    %v2733 = vsub.f32 %v458, %v2732
    %v2734 = vand.u32 %v2733, 4294901760
    %v2735 = vsub.f32 %v2733, %v2734
    %v2736 = vand.u32 %v2735, 4294901760
    %2737 = vmatpush.msra.mxu0 %v2736
    %v2738 = vand.u32 %v445, 4294901760
    %v2739 = vsub.f32 %v445, %v2738
    %v2740 = vand.u32 %v2739, 4294901760
    %v2741 = vsub.f32 %v2739, %v2740
    %v2742 = vand.u32 %v2741, 4294901760
    %2743 = vmatpush.msra.mxu0 %v2742
    %v2744 = vand.u32 %v432, 4294901760
    %v2745 = vsub.f32 %v432, %v2744
    %v2746 = vand.u32 %v2745, 4294901760
    %v2747 = vsub.f32 %v2745, %v2746
    %v2748 = vand.u32 %v2747, 4294901760
    %2749 = vmatpush.msra.mxu0 %v2748
    %v2750 = vand.u32 %v419, 4294901760
    %v2751 = vsub.f32 %v419, %v2750
    %v2752 = vand.u32 %v2751, 4294901760
    %v2753 = vsub.f32 %v2751, %v2752
    %v2754 = vand.u32 %v2753, 4294901760
    %2755 = vmatpush.msra.mxu0 %v2754
    %v2756 = vand.u32 %v505, 4294901760
    %2757 = vmatmul.f32.gmra.mxu0 %v2756
    %v2758 = vpop.f32.mrf.mxu0
    %v2759 = vadd.f32 %v2713, %v2758
    %2760 = vdwg.mxu0
    %2761 = vmatpush.msra.mxu0 0.0
    %2762 = vmatpush.msra.mxu0 0.0
    %2763 = vmatpush.msra.mxu0 0.0
    %2764 = vmatpush.msra.mxu0 0.0
    %2765 = vmatpush.msra.mxu0 0.0
    %2766 = vmatpush.msra.mxu0 0.0
    %2767 = vmatpush.msra.mxu0 0.0
    %2768 = vmatpush.msra.mxu0 0.0
    %2769 = vmatpush.msra.mxu0 0.0
    %2770 = vmatpush.msra.mxu0 0.0
    %2771 = vmatpush.msra.mxu0 0.0
    %v2772 = vand.u32 %v471, 4294901760
    %v2773 = vsub.f32 %v471, %v2772
    %2774 = vmatpush.msra.mxu0 %v2773
    %v2775 = vand.u32 %v458, 4294901760
    %v2776 = vsub.f32 %v458, %v2775
    %2777 = vmatpush.msra.mxu0 %v2776
    %v2778 = vand.u32 %v445, 4294901760
    %v2779 = vsub.f32 %v445, %v2778
    %2780 = vmatpush.msra.mxu0 %v2779
    %v2781 = vand.u32 %v432, 4294901760
    %v2782 = vsub.f32 %v432, %v2781
    %2783 = vmatpush.msra.mxu0 %v2782
    %v2784 = vand.u32 %v419, 4294901760
    %v2785 = vsub.f32 %v419, %v2784
    %2786 = vmatpush.msra.mxu0 %v2785
    %v2787 = vand.u32 %v505, 4294901760
    %v2788 = vsub.f32 %v505, %v2787
    %2789 = vmatmul.f32.gmra.mxu0 %v2788
    %v2790 = vpop.f32.mrf.mxu0
    %v2791 = vadd.f32 %v2759, %v2790
    %2792 = vdwg.mxu0
    %2793 = vmatpush.msra.mxu0 0.0
    %2794 = vmatpush.msra.mxu0 0.0
    %2795 = vmatpush.msra.mxu0 0.0
    %2796 = vmatpush.msra.mxu0 0.0
    %2797 = vmatpush.msra.mxu0 0.0
    %2798 = vmatpush.msra.mxu0 0.0
    %2799 = vmatpush.msra.mxu0 0.0
    %2800 = vmatpush.msra.mxu0 0.0
    %2801 = vmatpush.msra.mxu0 0.0
    %2802 = vmatpush.msra.mxu0 0.0
    %2803 = vmatpush.msra.mxu0 0.0
    %v2804 = vand.u32 %v471, 4294901760
    %2805 = vmatpush.msra.mxu0 %v2804
    %v2806 = vand.u32 %v458, 4294901760
    %2807 = vmatpush.msra.mxu0 %v2806
    %v2808 = vand.u32 %v445, 4294901760
    %2809 = vmatpush.msra.mxu0 %v2808
    %v2810 = vand.u32 %v432, 4294901760
    %2811 = vmatpush.msra.mxu0 %v2810
    %v2812 = vand.u32 %v419, 4294901760
    %2813 = vmatpush.msra.mxu0 %v2812
    %v2814 = vand.u32 %v505, 4294901760
    %v2815 = vsub.f32 %v505, %v2814
    %v2816 = vand.u32 %v2815, 4294901760
    %2817 = vmatmul.f32.gmra.mxu0 %v2816
    %v2818 = vpop.f32.mrf.mxu0
    %v2819 = vadd.f32 %v2791, %v2818
    %2820 = vdwg.mxu0
    %2821 = vmatpush.msra.mxu0 0.0
    %2822 = vmatpush.msra.mxu0 0.0
    %2823 = vmatpush.msra.mxu0 0.0
    %2824 = vmatpush.msra.mxu0 0.0
    %2825 = vmatpush.msra.mxu0 0.0
    %2826 = vmatpush.msra.mxu0 0.0
    %2827 = vmatpush.msra.mxu0 0.0
    %2828 = vmatpush.msra.mxu0 0.0
    %2829 = vmatpush.msra.mxu0 0.0
    %2830 = vmatpush.msra.mxu0 0.0
    %2831 = vmatpush.msra.mxu0 0.0
    %v2832 = vand.u32 %v471, 4294901760
    %v2833 = vsub.f32 %v471, %v2832
    %v2834 = vand.u32 %v2833, 4294901760
    %2835 = vmatpush.msra.mxu0 %v2834
    %v2836 = vand.u32 %v458, 4294901760
    %v2837 = vsub.f32 %v458, %v2836
    %v2838 = vand.u32 %v2837, 4294901760
    %2839 = vmatpush.msra.mxu0 %v2838
    %v2840 = vand.u32 %v445, 4294901760
    %v2841 = vsub.f32 %v445, %v2840
    %v2842 = vand.u32 %v2841, 4294901760
    %2843 = vmatpush.msra.mxu0 %v2842
    %v2844 = vand.u32 %v432, 4294901760
    %v2845 = vsub.f32 %v432, %v2844
    %v2846 = vand.u32 %v2845, 4294901760
    %2847 = vmatpush.msra.mxu0 %v2846
    %v2848 = vand.u32 %v419, 4294901760
    %v2849 = vsub.f32 %v419, %v2848
    %v2850 = vand.u32 %v2849, 4294901760
    %2851 = vmatpush.msra.mxu0 %v2850
    %v2852 = vand.u32 %v505, 4294901760
    %2853 = vmatmul.f32.gmra.mxu0 %v2852
    %v2854 = vpop.f32.mrf.mxu0
    %v2855 = vadd.f32 %v2819, %v2854
    %2856 = vdwg.mxu0
    %2857 = vmatpush.msra.mxu0 0.0
    %2858 = vmatpush.msra.mxu0 0.0
    %2859 = vmatpush.msra.mxu0 0.0
    %2860 = vmatpush.msra.mxu0 0.0
    %2861 = vmatpush.msra.mxu0 0.0
    %2862 = vmatpush.msra.mxu0 0.0
    %2863 = vmatpush.msra.mxu0 0.0
    %2864 = vmatpush.msra.mxu0 0.0
    %2865 = vmatpush.msra.mxu0 0.0
    %2866 = vmatpush.msra.mxu0 0.0
    %2867 = vmatpush.msra.mxu0 0.0
    %v2868 = vand.u32 %v471, 4294901760
    %2869 = vmatpush.msra.mxu0 %v2868
    %v2870 = vand.u32 %v458, 4294901760
    %2871 = vmatpush.msra.mxu0 %v2870
    %v2872 = vand.u32 %v445, 4294901760
    %2873 = vmatpush.msra.mxu0 %v2872
    %v2874 = vand.u32 %v432, 4294901760
    %2875 = vmatpush.msra.mxu0 %v2874
    %v2876 = vand.u32 %v419, 4294901760
    %2877 = vmatpush.msra.mxu0 %v2876
    %v2878 = vand.u32 %v505, 4294901760
    %2879 = vmatmul.f32.gmra.mxu0 %v2878
    %v2880 = vpop.f32.mrf.mxu0
    %v2881 = vadd.f32 %v2855, %v2880
    %2882 = vdwg.mxu0
    %2883 = vmatpush.msra.mxu0 0.0
    %2884 = vmatpush.msra.mxu0 0.0
    %2885 = vmatpush.msra.mxu0 0.0
    %2886 = vmatpush.msra.mxu0 0.0
    %2887 = vmatpush.msra.mxu0 0.0
    %2888 = vmatpush.msra.mxu0 0.0
    %2889 = vmatpush.msra.mxu0 0.0
    %2890 = vmatpush.msra.mxu0 0.0
    %2891 = vmatpush.msra.mxu0 0.0
    %2892 = vmatpush.msra.mxu0 0.0
    %2893 = vmatpush.msra.mxu0 0.0
    %v2894 = vand.u32 %v472, 4294901760
    %2895 = vmatpush.msra.mxu0 %v2894
    %v2896 = vand.u32 %v459, 4294901760
    %2897 = vmatpush.msra.mxu0 %v2896
    %v2898 = vand.u32 %v446, 4294901760
    %2899 = vmatpush.msra.mxu0 %v2898
    %v2900 = vand.u32 %v433, 4294901760
    %2901 = vmatpush.msra.mxu0 %v2900
    %v2902 = vand.u32 %v420, 4294901760
    %2903 = vmatpush.msra.mxu0 %v2902
    %v2904 = vand.u32 %v505, 4294901760
    %v2905 = vsub.f32 %v505, %v2904
    %v2906 = vand.u32 %v2905, 4294901760
    %v2907 = vsub.f32 %v2905, %v2906
    %v2908 = vand.u32 %v2907, 4294901760
    %2909 = vmatmul.f32.gmra.mxu0 %v2908
    %v2910 = vpop.f32.mrf.mxu0
    %v2911 = vadd.f32 %v489, %v2910
    %2912 = vdwg.mxu0
    %2913 = vmatpush.msra.mxu0 0.0
    %2914 = vmatpush.msra.mxu0 0.0
    %2915 = vmatpush.msra.mxu0 0.0
    %2916 = vmatpush.msra.mxu0 0.0
    %2917 = vmatpush.msra.mxu0 0.0
    %2918 = vmatpush.msra.mxu0 0.0
    %2919 = vmatpush.msra.mxu0 0.0
    %2920 = vmatpush.msra.mxu0 0.0
    %2921 = vmatpush.msra.mxu0 0.0
    %2922 = vmatpush.msra.mxu0 0.0
    %2923 = vmatpush.msra.mxu0 0.0
    %v2924 = vand.u32 %v472, 4294901760
    %v2925 = vsub.f32 %v472, %v2924
    %v2926 = vand.u32 %v2925, 4294901760
    %v2927 = vsub.f32 %v2925, %v2926
    %v2928 = vand.u32 %v2927, 4294901760
    %2929 = vmatpush.msra.mxu0 %v2928
    %v2930 = vand.u32 %v459, 4294901760
    %v2931 = vsub.f32 %v459, %v2930
    %v2932 = vand.u32 %v2931, 4294901760
    %v2933 = vsub.f32 %v2931, %v2932
    %v2934 = vand.u32 %v2933, 4294901760
    %2935 = vmatpush.msra.mxu0 %v2934
    %v2936 = vand.u32 %v446, 4294901760
    %v2937 = vsub.f32 %v446, %v2936
    %v2938 = vand.u32 %v2937, 4294901760
    %v2939 = vsub.f32 %v2937, %v2938
    %v2940 = vand.u32 %v2939, 4294901760
    %2941 = vmatpush.msra.mxu0 %v2940
    %v2942 = vand.u32 %v433, 4294901760
    %v2943 = vsub.f32 %v433, %v2942
    %v2944 = vand.u32 %v2943, 4294901760
    %v2945 = vsub.f32 %v2943, %v2944
    %v2946 = vand.u32 %v2945, 4294901760
    %2947 = vmatpush.msra.mxu0 %v2946
    %v2948 = vand.u32 %v420, 4294901760
    %v2949 = vsub.f32 %v420, %v2948
    %v2950 = vand.u32 %v2949, 4294901760
    %v2951 = vsub.f32 %v2949, %v2950
    %v2952 = vand.u32 %v2951, 4294901760
    %2953 = vmatpush.msra.mxu0 %v2952
    %v2954 = vand.u32 %v505, 4294901760
    %2955 = vmatmul.f32.gmra.mxu0 %v2954
    %v2956 = vpop.f32.mrf.mxu0
    %v2957 = vadd.f32 %v2911, %v2956
    %2958 = vdwg.mxu0
    %2959 = vmatpush.msra.mxu0 0.0
    %2960 = vmatpush.msra.mxu0 0.0
    %2961 = vmatpush.msra.mxu0 0.0
    %2962 = vmatpush.msra.mxu0 0.0
    %2963 = vmatpush.msra.mxu0 0.0
    %2964 = vmatpush.msra.mxu0 0.0
    %2965 = vmatpush.msra.mxu0 0.0
    %2966 = vmatpush.msra.mxu0 0.0
    %2967 = vmatpush.msra.mxu0 0.0
    %2968 = vmatpush.msra.mxu0 0.0
    %2969 = vmatpush.msra.mxu0 0.0
    %v2970 = vand.u32 %v472, 4294901760
    %v2971 = vsub.f32 %v472, %v2970
    %2972 = vmatpush.msra.mxu0 %v2971
    %v2973 = vand.u32 %v459, 4294901760
    %v2974 = vsub.f32 %v459, %v2973
    %2975 = vmatpush.msra.mxu0 %v2974
    %v2976 = vand.u32 %v446, 4294901760
    %v2977 = vsub.f32 %v446, %v2976
    %2978 = vmatpush.msra.mxu0 %v2977
    %v2979 = vand.u32 %v433, 4294901760
    %v2980 = vsub.f32 %v433, %v2979
    %2981 = vmatpush.msra.mxu0 %v2980
    %v2982 = vand.u32 %v420, 4294901760
    %v2983 = vsub.f32 %v420, %v2982
    %2984 = vmatpush.msra.mxu0 %v2983
    %v2985 = vand.u32 %v505, 4294901760
    %v2986 = vsub.f32 %v505, %v2985
    %2987 = vmatmul.f32.gmra.mxu0 %v2986
    %v2988 = vpop.f32.mrf.mxu0
    %v2989 = vadd.f32 %v2957, %v2988
    %2990 = vdwg.mxu0
    %2991 = vmatpush.msra.mxu0 0.0
    %2992 = vmatpush.msra.mxu0 0.0
    %2993 = vmatpush.msra.mxu0 0.0
    %2994 = vmatpush.msra.mxu0 0.0
    %2995 = vmatpush.msra.mxu0 0.0
    %2996 = vmatpush.msra.mxu0 0.0
    %2997 = vmatpush.msra.mxu0 0.0
    %2998 = vmatpush.msra.mxu0 0.0
    %2999 = vmatpush.msra.mxu0 0.0
    %3000 = vmatpush.msra.mxu0 0.0
    %3001 = vmatpush.msra.mxu0 0.0
    %v3002 = vand.u32 %v472, 4294901760
    %3003 = vmatpush.msra.mxu0 %v3002
    %v3004 = vand.u32 %v459, 4294901760
    %3005 = vmatpush.msra.mxu0 %v3004
    %v3006 = vand.u32 %v446, 4294901760
    %3007 = vmatpush.msra.mxu0 %v3006
    %v3008 = vand.u32 %v433, 4294901760
    %3009 = vmatpush.msra.mxu0 %v3008
    %v3010 = vand.u32 %v420, 4294901760
    %3011 = vmatpush.msra.mxu0 %v3010
    %v3012 = vand.u32 %v505, 4294901760
    %v3013 = vsub.f32 %v505, %v3012
    %v3014 = vand.u32 %v3013, 4294901760
    %3015 = vmatmul.f32.gmra.mxu0 %v3014
    %v3016 = vpop.f32.mrf.mxu0
    %v3017 = vadd.f32 %v2989, %v3016
    %3018 = vdwg.mxu0
    %3019 = vmatpush.msra.mxu0 0.0
    %3020 = vmatpush.msra.mxu0 0.0
    %3021 = vmatpush.msra.mxu0 0.0
    %3022 = vmatpush.msra.mxu0 0.0
    %3023 = vmatpush.msra.mxu0 0.0
    %3024 = vmatpush.msra.mxu0 0.0
    %3025 = vmatpush.msra.mxu0 0.0
    %3026 = vmatpush.msra.mxu0 0.0
    %3027 = vmatpush.msra.mxu0 0.0
    %3028 = vmatpush.msra.mxu0 0.0
    %3029 = vmatpush.msra.mxu0 0.0
    %v3030 = vand.u32 %v472, 4294901760
    %v3031 = vsub.f32 %v472, %v3030
    %v3032 = vand.u32 %v3031, 4294901760
    %3033 = vmatpush.msra.mxu0 %v3032
    %v3034 = vand.u32 %v459, 4294901760
    %v3035 = vsub.f32 %v459, %v3034
    %v3036 = vand.u32 %v3035, 4294901760
    %3037 = vmatpush.msra.mxu0 %v3036
    %v3038 = vand.u32 %v446, 4294901760
    %v3039 = vsub.f32 %v446, %v3038
    %v3040 = vand.u32 %v3039, 4294901760
    %3041 = vmatpush.msra.mxu0 %v3040
    %v3042 = vand.u32 %v433, 4294901760
    %v3043 = vsub.f32 %v433, %v3042
    %v3044 = vand.u32 %v3043, 4294901760
    %3045 = vmatpush.msra.mxu0 %v3044
    %v3046 = vand.u32 %v420, 4294901760
    %v3047 = vsub.f32 %v420, %v3046
    %v3048 = vand.u32 %v3047, 4294901760
    %3049 = vmatpush.msra.mxu0 %v3048
    %v3050 = vand.u32 %v505, 4294901760
    %3051 = vmatmul.f32.gmra.mxu0 %v3050
    %v3052 = vpop.f32.mrf.mxu0
    %v3053 = vadd.f32 %v3017, %v3052
    %3054 = vdwg.mxu0
    %3055 = vmatpush.msra.mxu0 0.0
    %3056 = vmatpush.msra.mxu0 0.0
    %3057 = vmatpush.msra.mxu0 0.0
    %3058 = vmatpush.msra.mxu0 0.0
    %3059 = vmatpush.msra.mxu0 0.0
    %3060 = vmatpush.msra.mxu0 0.0
    %3061 = vmatpush.msra.mxu0 0.0
    %3062 = vmatpush.msra.mxu0 0.0
    %3063 = vmatpush.msra.mxu0 0.0
    %3064 = vmatpush.msra.mxu0 0.0
    %3065 = vmatpush.msra.mxu0 0.0
    %v3066 = vand.u32 %v472, 4294901760
    %3067 = vmatpush.msra.mxu0 %v3066
    %v3068 = vand.u32 %v459, 4294901760
    %3069 = vmatpush.msra.mxu0 %v3068
    %v3070 = vand.u32 %v446, 4294901760
    %3071 = vmatpush.msra.mxu0 %v3070
    %v3072 = vand.u32 %v433, 4294901760
    %3073 = vmatpush.msra.mxu0 %v3072
    %v3074 = vand.u32 %v420, 4294901760
    %3075 = vmatpush.msra.mxu0 %v3074
    %v3076 = vand.u32 %v505, 4294901760
    %3077 = vmatmul.f32.gmra.mxu0 %v3076
    %v3078 = vpop.f32.mrf.mxu0
    %v3079 = vadd.f32 %v3053, %v3078
    %3080 = vdwg.mxu0
    %v3093 = vrot.slane %v901, 6
    %v3094 = vrot.slane %v1099, 4
    %v3095 = vrot.slane %v1297, 2
    %v3096 = vrot.slane %v1693, 6
    %v3097 = vrot.slane %v1891, 4
    %v3098 = vrot.slane %v2089, 2
    %v3099 = vrot.slane %v2485, 6
    %v3100 = vrot.slane %v2683, 4
    %v3101 = vrot.slane %v2881, 2
    %vm3102 = vcmask 1041408
    %v3103 = vsel %vm3102, %v703, %v3093
    %vm3104 = vcmask 1045508
    %v3105 = vsel %vm3104, %v3094, %v3095
    %vm3106 = vcmask 1043456
    %v3107 = vsel %vm3106, %v3103, %v3105
    %v3108 = vsel %vm3102, %v1495, %v3096
    %v3109 = vsel %vm3104, %v3097, %v3098
    %v3110 = vsel %vm3106, %v3108, %v3109
    %v3111 = vsel %vm3102, %v2287, %v3099
    %v3112 = vsel %vm3104, %v3100, %v3101
    %v3113 = vsel %vm3106, %v3111, %v3112
    %3117 = vst [vmem:[%s5] sm:$0xff] %v3107
    %3118 = vst [vmem:[%s5 + $0x8] sm:$0xff] %v3110
    %3119 = vst [vmem:[%s5 + $0x10] sm:$0xff] %v3113
    %vm3120 = vcmask 779264
    %3121 = vst.msk [vmem:[%s5 + $0x18] sm:$0x3] %vm3120, %v3079
    // Predicated region
    $region26: #{_lambda_.1} parent=1 // pred_check
      _
    $region27: #{_lambda_.1} parent=1 // pred_check_branch
      %3123 = sbr.rel (0) target = $region29
    $region28: #{_lambda_.1} parent=1 // pred_region
      _
    $region29: #{_lambda_.1} parent=1 // pred_fallthru
      _
    // Predicated region
    $region30: #{_lambda_.1} parent=1 // pred_check
      _
    $region31: #{_lambda_.1} parent=1 // pred_check_branch
      %3125 = sbr.rel (0) target = $region33
    $region32: #{_lambda_.1} parent=1 // pred_region
      _
    $region33: #{_lambda_.1} parent=1 // pred_fallthru
      _
    %3126 = vsyncpa [#allocation3], 1

</llo_original>
